<compile_context>
chip_gen: v6e
topology: v6e:2x2x1
jax: 0.10.0
libtpu: 0.0.40
codegen_flags: <defaults>
</compile_context>

<pallas_src>
import numpy as np

import jax
import jax.numpy as jnp
from jax.experimental import pallas as pl
from jax.experimental.pallas import tpu as pltpu

_NUM_CLASSES = 10
_TILE_B = 256            # rows per grid step (multiple of 8, fills MXU rows)
MATMUL_DTYPE = jnp.bfloat16   # operator-weight / matmul-input dtype (acc stays f32)


# ---------------------------------------------------------------------------
# Pallas kernel: the entire forward pass, fused, for one row-block of inputs.
# ---------------------------------------------------------------------------

def _fused_cnn_kernel(x_ref, a1_ref, b1_ref, a2_ref, a3_ref, w4_ref, w5_ref,
                      o_ref):
    """Five lane-dense MXU dots with f32 accumulation and f32 ReLU epilogues.

    conv layers use their pre-built dense operators; global-avg-pool is folded
    into w4 (the fc1 slab); biases of conv2/conv3/fc1/fc2 are folded into the
    operator matrices via a constant-1 lane that b1 plants in the padded
    region of the conv1 output.
    """

    def mm(h, a_ref):
        return jnp.dot(h.astype(a_ref.dtype), a_ref[...],
                       preferred_element_type=jnp.float32)

    h = x_ref[...]
    h = jnp.maximum(mm(h, a1_ref) + b1_ref[...], 0.0)   # conv1 + b1 (+const-1) + ReLU
    h = jnp.maximum(mm(h, a2_ref), 0.0)                 # conv2 (+bias folded)  + ReLU
    h = jnp.maximum(mm(h, a3_ref), 0.0)                 # conv3 (+bias folded)  + ReLU
    h = jnp.maximum(mm(h, w4_ref), 0.0)                 # GAP + fc1 (+bias)     + ReLU
    o_ref[...] = mm(h, w5_ref)                          # fc2 (+bias folded) -> padded logits


def fused_cnn_pallas(x_flat, weights):
    """x_flat: (B_padded, H*W) f32, B_padded % 8 == 0 (and % TILE_B if larger).

    weights: (a1, b1, a2, a3, w4, w5) produced by prepare_params.
    """
    padded_b, in_cols = x_flat.shape
    tile_b = min(_TILE_B, padded_b)
    assert padded_b % tile_b == 0 and tile_b % 8 == 0
    num_tiles = padded_b // tile_b
    out_cols = weights[-1].shape[1]              # padded logit width (128)

    # x / out are blocked over the batch; all weight operands use a constant
    # index_map so they are fetched once and stay VMEM-resident across steps.
    x_spec = pl.BlockSpec((tile_b, in_cols), lambda i: (i, 0))
    w_specs = [pl.BlockSpec(w.shape, lambda i: (0, 0)) for w in weights]
    out_spec = pl.BlockSpec((tile_b, out_cols), lambda i: (i, 0))

    mats = (weights[0], weights[2], weights[3], weights[4], weights[5])
    flops = 2 * padded_b * sum(int(m.shape[0]) * int(m.shape[1]) for m in mats)
    bytes_accessed = (
        int(x_flat.size) * x_flat.dtype.itemsize
        + sum(int(w.size) * w.dtype.itemsize for w in weights)
        + padded_b * int(out_cols) * 4)

    return pl.pallas_call(
        _fused_cnn_kernel,
        out_shape=jax.ShapeDtypeStruct((padded_b, out_cols), jnp.float32),
        grid=(num_tiles,),
        in_specs=[x_spec] + w_specs,
        out_specs=out_spec,
        compiler_params=pltpu.CompilerParams(
            # Batch row-blocks are independent -> v7x's two TensorCores each
            # take half of them; no effect on single-TC v5e/v6e.
            dimension_semantics=("parallel",)),
        cost_estimate=pl.CostEstimate(
            flops=flops, transcendentals=0, bytes_accessed=bytes_accessed),
    )(x_flat, *weights)


# ---------------------------------------------------------------------------
# One-time parameter lowering (outside jit): conv -> dense operator, GAP fold,
# bias fold via a constant-1 lane, fc transposes, lane padding, bf16 cast.
# ---------------------------------------------------------------------------

def _round_up(n, m):
    return ((n + m - 1) // m) * m


def _pad2d(a, rows, cols):
    out = np.zeros((rows, cols), np.float32)
    out[:a.shape[0], :a.shape[1]] = a
    return out


def _conv_as_matrix(w, h_in, w_in, stride, pad):
    """Dense operator of a 2-D conv (PyTorch cross-correlation, zero padding).

    w: (Cout, Cin, kh, kw).  Acts on the channel-last flattened input
    x_flat[(iy*w_in + ix)*Cin + ci] and produces
    y_flat[(oy*w_out + ox)*Cout + co].
    """
    w = np.asarray(w, np.float32)
    c_out, c_in, kh, kw = w.shape
    h_out = (h_in + 2 * pad - kh) // stride + 1
    w_out = (w_in + 2 * pad - kw) // stride + 1
    mat = np.zeros((h_in * w_in * c_in, h_out * w_out * c_out), np.float32)
    for oy in range(h_out):
        for ox in range(w_out):
            col0 = (oy * w_out + ox) * c_out
            for dy in range(kh):
                iy = oy * stride + dy - pad
                if not (0 <= iy < h_in):
                    continue
                for dx in range(kw):
                    ix = ox * stride + dx - pad
                    if not (0 <= ix < w_in):
                        continue
                    row0 = (iy * w_in + ix) * c_in
                    mat[row0:row0 + c_in, col0:col0 + c_out] += w[:, :, dy, dx].T
    return mat, h_out, w_out


def prepare_params(params, height=16, width=16):
    """PyTorch-layout params -> padded, lane-dense, bf16 operands."""
    w1, b1 = np.asarray(params['w1'], np.float32), np.asarray(params['b1'], np.float32)
    w2, b2 = np.asarray(params['w2'], np.float32), np.asarray(params['b2'], np.float32)
    w3, b3 = np.asarray(params['w3'], np.float32), np.asarray(params['b3'], np.float32)
    fc1_w, fc1_b = np.asarray(params['fc1_w'], np.float32), np.asarray(params['fc1_b'], np.float32)
    fc2_w, fc2_b = np.asarray(params['fc2_w'], np.float32), np.asarray(params['fc2_b'], np.float32)

    a1, h1, w1s = _conv_as_matrix(w1, height, width, stride=2, pad=0)  # valid
    a2, h2, w2s = _conv_as_matrix(w2, h1, w1s, stride=1, pad=1)        # same
    a3, h3, w3s = _conv_as_matrix(w3, h2, w2s, stride=2, pad=0)        # valid

    c1, c2, c3 = w1.shape[0], w2.shape[0], w3.shape[0]
    f1 = fc1_w.shape[0]
    n_cls = fc2_w.shape[0]
    n0 = height * width * 1                              # 256  (Cin = 1)
    n1, n2, n3 = h1 * w1s * c1, h2 * w2s * c2, h3 * w3s * c3   # 392, 392, 144
    p0, p1, p2, p3 = (_round_up(n, 128) for n in (n0, n1, n2, n3))
    pf1 = _round_up(f1, 128)
    pf2 = _round_up(n_cls, 128)
    assert p0 == n0, "input width must already be lane-aligned for this model"
    # The bias fold needs a free padded lane in every intermediate activation
    # to carry the constant 1.
    assert n1 < p1 and n2 < p2 and n3 < p3 and f1 < pf1

    # conv1 operator + its (only remaining) f32 bias row; b1 also plants the
    # constant 1.0 at lane n1 that carries all downstream (folded) biases.
    a1_p = _pad2d(a1, p0, p1)
    b1_p = _pad2d(np.tile(b1, h1 * w1s)[None, :], 1, p1)
    b1_p[0, n1] = 1.0

    def fold_bias(mat, bias_row, in_const_lane, out_const_lane, rows, cols):
        m = _pad2d(mat, rows, cols)
        m[in_const_lane, :bias_row.shape[0]] = bias_row
        if out_const_lane is not None:
            m[in_const_lane, out_const_lane] = 1.0       # propagate the constant 1
        return m

    a2_p = fold_bias(a2, np.tile(b2, h2 * w2s), n1, n2, p1, p2)
    a3_p = fold_bias(a3, np.tile(b3, h3 * w3s), n2, n3, p2, p3)

    # AdaptiveAvgPool2d(1) is linear -> fold it into the fc1 weight slab.
    n_pos = h3 * w3s
    w4 = np.tile(fc1_w.T / float(n_pos), (n_pos, 1))     # (n3, f1)
    w4_p = fold_bias(w4, fc1_b, n3, f1, p3, pf1)
    w5_p = fold_bias(fc2_w.T, fc2_b, f1, None, pf1, pf2)

    # Operators (and their folded biases) go to bf16; accumulation and the
    # conv1 bias epilogue stay f32.
    mats = tuple(jnp.asarray(m, MATMUL_DTYPE) for m in (a1_p, a2_p, a3_p, w4_p, w5_p))
    b1_j = jnp.asarray(b1_p, jnp.float32)
    return (mats[0], b1_j, mats[1], mats[2], mats[3], mats[4])


# ---------------------------------------------------------------------------
# Forward pass (jit-able): reshape + row-pad in, one pallas_call, slice out.
# ---------------------------------------------------------------------------

def cnn_forward(weights, x_nchw):
    """Matches CNN.forward: NCHW f32 input -> (B, 10) logits."""
    batch = x_nchw.shape[0]
    # Cin == 1, so NCHW row-major flatten equals the (h*W + w) order the conv1
    # operator expects.
    x_flat = x_nchw.reshape(batch, -1).astype(jnp.float32)
    # Pad rows to the f32 sublane multiple (8) / the batch tile.
    if batch <= _TILE_B:
        padded_b = _round_up(batch, 8)
    else:
        padded_b = _round_up(batch, _TILE_B)
    if padded_b != batch:
        x_flat = jnp.pad(x_flat, ((0, padded_b - batch), (0, 0)))
    logits_padded = fused_cnn_pallas(x_flat, weights)
    return logits_padded[:batch, :_NUM_CLASSES]


# ---------------------------------------------------------------------------
# Deterministic synthetic init (PyTorch layouts) and a pure-JAX reference.
# ---------------------------------------------------------------------------

def init_params(key, l1_chan=8, l2_chan=8, l3_chan=16, fc1_out=32):
    def u(k, shape, scale=0.1):
        return jax.random.uniform(k, shape, jnp.float32, -scale, scale)
    ks = jax.random.split(key, 10)
    return {
        'w1': u(ks[0], (l1_chan, 1, 3, 3)),        'b1': u(ks[1], (l1_chan,)),
        'w2': u(ks[2], (l2_chan, l1_chan, 3, 3)),  'b2': u(ks[3], (l2_chan,)),
        'w3': u(ks[4], (l3_chan, l2_chan, 3, 3)),  'b3': u(ks[5], (l3_chan,)),
        'fc1_w': u(ks[6], (fc1_out, l3_chan)),     'fc1_b': u(ks[7], (fc1_out,)),
        'fc2_w': u(ks[8], (10, fc1_out)),          'fc2_b': u(ks[9], (10,)),
    }


def _reference_forward(params, x_nchw):
    """Pure-JAX f32 reference of the PyTorch module (correctness check)."""
    hi = jax.lax.Precision.HIGHEST

    def conv(x, w, b, stride, padding):
        y = jax.lax.conv_general_dilated(
            x, w, window_strides=(stride, stride), padding=padding,
            dimension_numbers=('NCHW', 'OIHW', 'NCHW'), precision=hi)
        return jax.nn.relu(y + b[None, :, None, None])

    h = conv(x_nchw, params['w1'], params['b1'], 2, 'VALID')
    h = conv(h, params['w2'], params['b2'], 1, 'SAME')
    h = conv(h, params['w3'], params['b3'], 2, 'VALID')
    g = jnp.mean(h, axis=(2, 3))                       # AdaptiveAvgPool2d(1) + squeeze
    g = jax.nn.relu(jnp.dot(g, params['fc1_w'].T, precision=hi) + params['fc1_b'])
    return jnp.dot(g, params['fc2_w'].T, precision=hi) + params['fc2_b']


if __name__ == "__main__":
    key = jax.random.PRNGKey(0)
    k_x, k_p = jax.random.split(key)
    x = jax.random.normal(k_x, (2, 1, 16, 16), dtype=jnp.float32)  # NCHW, Cin=1
    params = init_params(k_p, l1_chan=8, l2_chan=8, l3_chan=16, fc1_out=32)

    weights = prepare_params(params, height=16, width=16)   # once, outside jit
    forward = jax.jit(cnn_forward)

    logits = jax.block_until_ready(forward(weights, x))
    assert logits.shape == (2, 10), logits.shape
    assert logits.dtype == jnp.float32

    # bf16 operators (f32 accumulation) vs. an f32 HIGHEST-precision reference:
    # tolerances are loosened accordingly.
    ref = _reference_forward(params, x)
    np.testing.assert_allclose(np.asarray(logits), np.asarray(ref),
                               rtol=5e-2, atol=2e-2)
    print("KERNEL_OK")
</pallas_src>

<mosaic_0001>
module attributes {stable_mosaic.version = 11 : i64} {
  func.func @_fused_cnn_kernel(%arg0: i32, %arg1: memref<8x256xf32, #tpu.memory_space<vmem>>, %arg2: memref<256x512xbf16, #tpu.memory_space<vmem>>, %arg3: memref<1x512xf32, #tpu.memory_space<vmem>>, %arg4: memref<512x512xbf16, #tpu.memory_space<vmem>>, %arg5: memref<512x256xbf16, #tpu.memory_space<vmem>>, %arg6: memref<256x128xbf16, #tpu.memory_space<vmem>>, %arg7: memref<128x128xbf16, #tpu.memory_space<vmem>>, %arg8: memref<8x128xf32, #tpu.memory_space<vmem>>) attributes {dimension_semantics = [#tpu.dimension_semantics<parallel>], iteration_bounds = array<i64: 1>, scalar_prefetch = 0 : i64, scratch_operands = 0 : i64, tpu.core_type = #tpu.core_type<tc>, window_params = [{transform_indices = @transform_0, window_bounds = array<i64: 8, 256>}, {pipeline_mode = #tpu.pipeline_mode<synchronous>, transform_indices = @transform_1, window_bounds = array<i64: 256, 512>}, {pipeline_mode = #tpu.pipeline_mode<synchronous>, transform_indices = @transform_2, window_bounds = array<i64: 1, 512>}, {pipeline_mode = #tpu.pipeline_mode<synchronous>, transform_indices = @transform_3, window_bounds = array<i64: 512, 512>}, {pipeline_mode = #tpu.pipeline_mode<synchronous>, transform_indices = @transform_4, window_bounds = array<i64: 512, 256>}, {pipeline_mode = #tpu.pipeline_mode<synchronous>, transform_indices = @transform_5, window_bounds = array<i64: 256, 128>}, {pipeline_mode = #tpu.pipeline_mode<synchronous>, transform_indices = @transform_6, window_bounds = array<i64: 128, 128>}, {transform_indices = @transform_7, window_bounds = array<i64: 8, 128>}]} {
    %c0 = arith.constant 0 : index
    %c0_0 = arith.constant 0 : index
    %0 = vector.load %arg1[%c0, %c0_0] : memref<8x256xf32, #tpu.memory_space<vmem>>, vector<8x256xf32>
    %1 = arith.truncf %0 : vector<8x256xf32> to vector<8x256xbf16>
    %c0_1 = arith.constant 0 : index
    %c0_2 = arith.constant 0 : index
    %2 = vector.load %arg2[%c0_1, %c0_2] : memref<256x512xbf16, #tpu.memory_space<vmem>>, vector<256x512xbf16>
    %cst = arith.constant dense<0.000000e+00> : vector<8x512xf32>
    %3 = tpu.matmul %1, %2, %cst {dimension_numbers = #tpu.dot_dimension_numbers<[1], [0], [0], [1], [0, 0, 1, 1], [], []>} : vector<8x256xbf16>, vector<256x512xbf16>, vector<8x512xf32> -> vector<8x512xf32>
    %c0_3 = arith.constant 0 : index
    %c0_4 = arith.constant 0 : index
    %4 = vector.load %arg3[%c0_3, %c0_4] : memref<1x512xf32, #tpu.memory_space<vmem>>, vector<1x512xf32>
    %5 = vector.broadcast %4 : vector<1x512xf32> to vector<8x512xf32>
    %6 = arith.addf %3, %5 : vector<8x512xf32>
    %cst_5 = arith.constant 0.000000e+00 : f32
    %7 = vector.broadcast %cst_5 : f32 to vector<8x512xf32>
    %8 = arith.maximumf %6, %7 : vector<8x512xf32>
    %9 = arith.truncf %8 : vector<8x512xf32> to vector<8x512xbf16>
    %c0_6 = arith.constant 0 : index
    %c0_7 = arith.constant 0 : index
    %10 = vector.load %arg4[%c0_6, %c0_7] : memref<512x512xbf16, #tpu.memory_space<vmem>>, vector<512x512xbf16>
    %cst_8 = arith.constant dense<0.000000e+00> : vector<8x512xf32>
    %11 = tpu.matmul %9, %10, %cst_8 {dimension_numbers = #tpu.dot_dimension_numbers<[1], [0], [0], [1], [0, 0, 1, 1], [], []>} : vector<8x512xbf16>, vector<512x512xbf16>, vector<8x512xf32> -> vector<8x512xf32>
    %cst_9 = arith.constant 0.000000e+00 : f32
    %12 = vector.broadcast %cst_9 : f32 to vector<8x512xf32>
    %13 = arith.maximumf %11, %12 : vector<8x512xf32>
    %14 = arith.truncf %13 : vector<8x512xf32> to vector<8x512xbf16>
    %c0_10 = arith.constant 0 : index
    %c0_11 = arith.constant 0 : index
    %15 = vector.load %arg5[%c0_10, %c0_11] : memref<512x256xbf16, #tpu.memory_space<vmem>>, vector<512x256xbf16>
    %cst_12 = arith.constant dense<0.000000e+00> : vector<8x256xf32>
    %16 = tpu.matmul %14, %15, %cst_12 {dimension_numbers = #tpu.dot_dimension_numbers<[1], [0], [0], [1], [0, 0, 1, 1], [], []>} : vector<8x512xbf16>, vector<512x256xbf16>, vector<8x256xf32> -> vector<8x256xf32>
    %cst_13 = arith.constant 0.000000e+00 : f32
    %17 = vector.broadcast %cst_13 : f32 to vector<8x256xf32>
    %18 = arith.maximumf %16, %17 : vector<8x256xf32>
    %19 = arith.truncf %18 : vector<8x256xf32> to vector<8x256xbf16>
    %c0_14 = arith.constant 0 : index
    %c0_15 = arith.constant 0 : index
    %20 = vector.load %arg6[%c0_14, %c0_15] : memref<256x128xbf16, #tpu.memory_space<vmem>>, vector<256x128xbf16>
    %cst_16 = arith.constant dense<0.000000e+00> : vector<8x128xf32>
    %21 = tpu.matmul %19, %20, %cst_16 {dimension_numbers = #tpu.dot_dimension_numbers<[1], [0], [0], [1], [0, 0, 1, 1], [], []>} : vector<8x256xbf16>, vector<256x128xbf16>, vector<8x128xf32> -> vector<8x128xf32>
    %cst_17 = arith.constant 0.000000e+00 : f32
    %22 = vector.broadcast %cst_17 : f32 to vector<8x128xf32>
    %23 = arith.maximumf %21, %22 : vector<8x128xf32>
    %24 = arith.truncf %23 : vector<8x128xf32> to vector<8x128xbf16>
    %c0_18 = arith.constant 0 : index
    %c0_19 = arith.constant 0 : index
    %25 = vector.load %arg7[%c0_18, %c0_19] : memref<128x128xbf16, #tpu.memory_space<vmem>>, vector<128x128xbf16>
    %cst_20 = arith.constant dense<0.000000e+00> : vector<8x128xf32>
    %26 = tpu.matmul %24, %25, %cst_20 {dimension_numbers = #tpu.dot_dimension_numbers<[1], [0], [0], [1], [0, 0, 1, 1], [], []>} : vector<8x128xbf16>, vector<128x128xbf16>, vector<8x128xf32> -> vector<8x128xf32>
    %c0_21 = arith.constant 0 : index
    %c0_22 = arith.constant 0 : index
    %27 = vector.load %arg8[%c0_21, %c0_22] : memref<8x128xf32, #tpu.memory_space<vmem>>, vector<8x128xf32>
    tpu.vector_store %arg8[%c0_21, %c0_22], %26 {strides = array<i32>} : memref<8x128xf32, #tpu.memory_space<vmem>>, vector<8x128xf32>,
    return
  }
  func.func @transform_0(%arg0: i32) -> (i32, i32) {
    %c0_i32 = arith.constant 0 : i32
    %c0_i32_0 = arith.constant 0 : i32
    return %arg0, %c0_i32 : i32, i32
  }
  func.func @transform_1(%arg0: i32) -> (i32, i32) {
    %c0_i32 = arith.constant 0 : i32
    %c0_i32_0 = arith.constant 0 : i32
    %c0_i32_1 = arith.constant 0 : i32
    return %c0_i32, %c0_i32_0 : i32, i32
  }
  func.func @transform_2(%arg0: i32) -> (i32, i32) {
    %c0_i32 = arith.constant 0 : i32
    %c0_i32_0 = arith.constant 0 : i32
    %c0_i32_1 = arith.constant 0 : i32
    return %c0_i32, %c0_i32_0 : i32, i32
  }
  func.func @transform_3(%arg0: i32) -> (i32, i32) {
    %c0_i32 = arith.constant 0 : i32
    %c0_i32_0 = arith.constant 0 : i32
    %c0_i32_1 = arith.constant 0 : i32
    return %c0_i32, %c0_i32_0 : i32, i32
  }
  func.func @transform_4(%arg0: i32) -> (i32, i32) {
    %c0_i32 = arith.constant 0 : i32
    %c0_i32_0 = arith.constant 0 : i32
    %c0_i32_1 = arith.constant 0 : i32
    return %c0_i32, %c0_i32_0 : i32, i32
  }
  func.func @transform_5(%arg0: i32) -> (i32, i32) {
    %c0_i32 = arith.constant 0 : i32
    %c0_i32_0 = arith.constant 0 : i32
    %c0_i32_1 = arith.constant 0 : i32
    return %c0_i32, %c0_i32_0 : i32, i32
  }
  func.func @transform_6(%arg0: i32) -> (i32, i32) {
    %c0_i32 = arith.constant 0 : i32
    %c0_i32_0 = arith.constant 0 : i32
    %c0_i32_1 = arith.constant 0 : i32
    return %c0_i32, %c0_i32_0 : i32, i32
  }
  func.func @transform_7(%arg0: i32) -> (i32, i32) {
    %c0_i32 = arith.constant 0 : i32
    %c0_i32_0 = arith.constant 0 : i32
    return %arg0, %c0_i32 : i32, i32
  }
}

</mosaic_0001>

<llo_original>
// kernel: cnn_forward.1
$region0: #{cnn_forward.1}
  #allocation0 [shape = 'u32[]', space=smem, size = 0x4, offset = 0x4, fixed_abs, tag = 'smem constant byte address 0x4 - core index']
  #allocation1 [shape = 'u32[144,128]{1,0:T(1,128)}', space=vmem, size = 0x12000, scoped, tag = 'internal scratch']
  %s0 = inlined_call_operand.vmem [shape: f32[8,256], index: 0, kind: input, shape index: {}]
  %s1 = inlined_call_operand.hbm [shape: bf16[256,512], index: 1, kind: input, shape index: {}]
  %s2 = inlined_call_operand.hbm [shape: f32[1,512], index: 2, kind: input, shape index: {}]
  %s3 = inlined_call_operand.hbm [shape: bf16[512,512], index: 3, kind: input, shape index: {}]
  %s4 = inlined_call_operand.hbm [shape: bf16[512,256], index: 4, kind: input, shape index: {}]
  %s5 = inlined_call_operand.hbm [shape: bf16[256,128], index: 5, kind: input, shape index: {}]
  %s6 = inlined_call_operand.vmem [shape: bf16[128,128], index: 6, kind: input, shape index: {}]
  %s7 = inlined_call_operand.vmem [shape: f32[8,128], index: 7, kind: output, shape index: {}]
  %s8 = sld [smem:[#allocation0]]
  $region58: #{cnn_forward.1} parent=0
    _
  %s10 = ssub.s32 1, %s8
  %s11 = scalar_select 0, %s10, %s8
  $region1: #{cnn_forward.1} parent=0
    #allocation2 [shape = 'u8[262144]{0}', space=vmem, size = 0x40000, scoped, tag = 'input window, operand 1, single buffered']
    #allocation3 [shape = 's32[1]{0}', space=sflag, size = 0x4, scoped, tag = 'scoped memory for cnn_forward.1']
    #allocation4 [shape = 'u8[2048]{0}', space=vmem, size = 0x800, scoped, tag = 'input window, operand 2, single buffered']
    #allocation5 [shape = 's32[1]{0}', space=sflag, size = 0x4, scoped, tag = 'scoped memory for cnn_forward.1']
    #allocation6 [shape = 'u8[524288]{0}', space=vmem, size = 0x80000, scoped, tag = 'input window, operand 3, single buffered']
    #allocation7 [shape = 'u8[262144]{0}', space=vmem, size = 0x40000, scoped, tag = 'input window, operand 4, single buffered']
    #allocation8 [shape = 's32[1]{0}', space=sflag, size = 0x4, scoped, tag = 'scoped memory for cnn_forward.1']
    #allocation9 [shape = 'u8[65536]{0}', space=vmem, size = 0x10000, scoped, tag = 'input window, operand 5, single buffered']
    %12 = vsyncpa [#allocation3], 0
    %13 = vsyncpa [#allocation5], 0
    %14 = vsyncpa [#allocation8], 0
    // Predicated region
    $region2: #{cnn_forward.1} parent=1 // pred_check
      _
    $region3: #{cnn_forward.1} parent=1 // pred_check_branch
      %16 = sbr.rel (0) target = $region5
    $region4: #{cnn_forward.1} parent=1 // pred_region
      _
    $region5: #{cnn_forward.1} parent=1 // pred_fallthru
      _
    // Predicated region
    $region6: #{cnn_forward.1} parent=1 // pred_check
      _
    $region7: #{cnn_forward.1} parent=1 // pred_check_branch
      %18 = sbr.rel (0) target = $region9
    $region8: #{cnn_forward.1} parent=1 // pred_region
      %s20 = ssub.s32 8192, 8192
      %21 = vsyncadd [#allocation3], %s20
      %s22 = sshll.u32 [#allocation2], 4
      %s23 = int_to_ptr.vmem [resolvable:$true] %s22
      %28 = dma.hbm_to_vmem [thread:$0]  %s1, 8192, %s23, [#allocation3], 256, 256, 16
    $region9: #{cnn_forward.1} parent=1 // pred_fallthru
      _
    // Predicated region
    $region10: #{cnn_forward.1} parent=1 // pred_check
      _
    $region11: #{cnn_forward.1} parent=1 // pred_check_branch
      %30 = sbr.rel (0) target = $region13
    $region12: #{cnn_forward.1} parent=1 // pred_region
      %s32 = ssub.s32 64, 64
      %33 = vsyncadd [#allocation5], %s32
      %s35 = sshll.u32 [#allocation4], 4
      %s36 = int_to_ptr.vmem [resolvable:$true] %s35
      %38 = dma.hbm_to_vmem [thread:$0]  %s2, 64, %s36, [#allocation5]
    $region13: #{cnn_forward.1} parent=1 // pred_fallthru
      _
    // Predicated region
    $region14: #{cnn_forward.1} parent=1 // pred_check
      _
    $region15: #{cnn_forward.1} parent=1 // pred_check_branch
      %40 = sbr.rel (0) target = $region17
    $region16: #{cnn_forward.1} parent=1 // pred_region
      %s42 = ssub.s32 16384, 16384
      %43 = vsyncadd [#allocation5], %s42
      %s44 = sshll.u32 [#allocation6], 4
      %s45 = int_to_ptr.vmem [resolvable:$true] %s44
      %50 = dma.hbm_to_vmem [thread:$0]  %s3, 16384, %s45, [#allocation5], 256, 256, 16
    $region17: #{cnn_forward.1} parent=1 // pred_fallthru
      _
    // Predicated region
    $region18: #{cnn_forward.1} parent=1 // pred_check
      _
    $region19: #{cnn_forward.1} parent=1 // pred_check_branch
      %52 = sbr.rel (0) target = $region21
    $region20: #{cnn_forward.1} parent=1 // pred_region
      %s54 = ssub.s32 8192, 8192
      %55 = vsyncadd [#allocation8], %s54
      %s56 = sshll.u32 [#allocation7], 4
      %s57 = int_to_ptr.vmem [resolvable:$true] %s56
      %62 = dma.hbm_to_vmem [thread:$0]  %s4, 8192, %s57, [#allocation8], 128, 128, 8
    $region21: #{cnn_forward.1} parent=1 // pred_fallthru
      _
    // Predicated region
    $region22: #{cnn_forward.1} parent=1 // pred_check
      _
    $region23: #{cnn_forward.1} parent=1 // pred_check_branch
      %64 = sbr.rel (0) target = $region25
    $region24: #{cnn_forward.1} parent=1 // pred_region
      %s66 = ssub.s32 2048, 2048
      %67 = vsyncadd [#allocation8], %s66
      %s68 = sshll.u32 [#allocation9], 4
      %s69 = int_to_ptr.vmem [resolvable:$true] %s68
      %74 = dma.hbm_to_vmem [thread:$0]  %s5, 2048, %s69, [#allocation8], 64, 64, 4
    $region25: #{cnn_forward.1} parent=1 // pred_fallthru
      _
    // Predicated region
    $region26: #{cnn_forward.1} parent=1 // pred_check
      _
    $region27: #{cnn_forward.1} parent=1 // pred_check_branch
      %76 = sbr.rel (0) target = $region29
    $region28: #{cnn_forward.1} parent=1 // pred_region
      _
    $region29: #{cnn_forward.1} parent=1 // pred_fallthru
      _
    // Predicated region
    $region30: #{cnn_forward.1} parent=1 // pred_check
      _
    $region31: #{cnn_forward.1} parent=1 // pred_check_branch
      %78 = sbr.rel (0) target = $region33
    $region32: #{cnn_forward.1} parent=1 // pred_region
      %79 = dma.done [#allocation3], 8192
    $region33: #{cnn_forward.1} parent=1 // pred_fallthru
      _
    // Predicated region
    $region34: #{cnn_forward.1} parent=1 // pred_check
      _
    $region35: #{cnn_forward.1} parent=1 // pred_check_branch
      %81 = sbr.rel (0) target = $region37
    $region36: #{cnn_forward.1} parent=1 // pred_region
      %82 = dma.done [#allocation5], 64
    $region37: #{cnn_forward.1} parent=1 // pred_fallthru
      _
    // Predicated region
    $region38: #{cnn_forward.1} parent=1 // pred_check
      _
    $region39: #{cnn_forward.1} parent=1 // pred_check_branch
      %84 = sbr.rel (0) target = $region41
    $region40: #{cnn_forward.1} parent=1 // pred_region
      %85 = dma.done [#allocation5], 16384
    $region41: #{cnn_forward.1} parent=1 // pred_fallthru
      _
    // Predicated region
    $region42: #{cnn_forward.1} parent=1 // pred_check
      _
    $region43: #{cnn_forward.1} parent=1 // pred_check_branch
      %87 = sbr.rel (0) target = $region45
    $region44: #{cnn_forward.1} parent=1 // pred_region
      %88 = dma.done [#allocation8], 8192
    $region45: #{cnn_forward.1} parent=1 // pred_fallthru
      _
    // Predicated region
    $region46: #{cnn_forward.1} parent=1 // pred_check
      _
    $region47: #{cnn_forward.1} parent=1 // pred_check_branch
      %90 = sbr.rel (0) target = $region49
    $region48: #{cnn_forward.1} parent=1 // pred_region
      %91 = dma.done [#allocation8], 2048
    $region49: #{cnn_forward.1} parent=1 // pred_fallthru
      _
    %v93 = vld [vmem:[%s0] sm:$0xff]
    %v94 = vld [vmem:[%s0 + $0x8] sm:$0xff]
    %v95 = vpack.c.bf16 %v93, %v93
    %v96 = vpack.c.bf16 %v94, %v94
    %v97 = vld [vmem:[#allocation2] sm:$0xff]
    %v98 = vld [vmem:[#allocation2 + $0x8] sm:$0xff]
    %v99 = vld [vmem:[#allocation2 + $0x10] sm:$0xff]
    %v100 = vld [vmem:[#allocation2 + $0x18] sm:$0xff]
    %v101 = vld [vmem:[#allocation2 + $0x20] sm:$0xff]
    %v102 = vld [vmem:[#allocation2 + $0x28] sm:$0xff]
    %v103 = vld [vmem:[#allocation2 + $0x30] sm:$0xff]
    %v104 = vld [vmem:[#allocation2 + $0x38] sm:$0xff]
    %v105 = vld [vmem:[#allocation2 + $0x40] sm:$0xff]
    %v106 = vld [vmem:[#allocation2 + $0x48] sm:$0xff]
    %v107 = vld [vmem:[#allocation2 + $0x50] sm:$0xff]
    %v108 = vld [vmem:[#allocation2 + $0x58] sm:$0xff]
    %v109 = vld [vmem:[#allocation2 + $0x60] sm:$0xff]
    %v110 = vld [vmem:[#allocation2 + $0x68] sm:$0xff]
    %v111 = vld [vmem:[#allocation2 + $0x70] sm:$0xff]
    %v112 = vld [vmem:[#allocation2 + $0x78] sm:$0xff]
    %v113 = vld [vmem:[#allocation2 + $0x80] sm:$0xff]
    %v114 = vld [vmem:[#allocation2 + $0x88] sm:$0xff]
    %v115 = vld [vmem:[#allocation2 + $0x90] sm:$0xff]
    %v116 = vld [vmem:[#allocation2 + $0x98] sm:$0xff]
    %v117 = vld [vmem:[#allocation2 + $0xa0] sm:$0xff]
    %v118 = vld [vmem:[#allocation2 + $0xa8] sm:$0xff]
    %v119 = vld [vmem:[#allocation2 + $0xb0] sm:$0xff]
    %v120 = vld [vmem:[#allocation2 + $0xb8] sm:$0xff]
    %v121 = vld [vmem:[#allocation2 + $0xc0] sm:$0xff]
    %v122 = vld [vmem:[#allocation2 + $0xc8] sm:$0xff]
    %v123 = vld [vmem:[#allocation2 + $0xd0] sm:$0xff]
    %v124 = vld [vmem:[#allocation2 + $0xd8] sm:$0xff]
    %v125 = vld [vmem:[#allocation2 + $0xe0] sm:$0xff]
    %v126 = vld [vmem:[#allocation2 + $0xe8] sm:$0xff]
    %v127 = vld [vmem:[#allocation2 + $0xf0] sm:$0xff]
    %v128 = vld [vmem:[#allocation2 + $0xf8] sm:$0xff]
    %v129 = vld [vmem:[#allocation2 + $0x100] sm:$0xff]
    %v130 = vld [vmem:[#allocation2 + $0x108] sm:$0xff]
    %v131 = vld [vmem:[#allocation2 + $0x110] sm:$0xff]
    %v132 = vld [vmem:[#allocation2 + $0x118] sm:$0xff]
    %v133 = vld [vmem:[#allocation2 + $0x120] sm:$0xff]
    %v134 = vld [vmem:[#allocation2 + $0x128] sm:$0xff]
    %v135 = vld [vmem:[#allocation2 + $0x130] sm:$0xff]
    %v136 = vld [vmem:[#allocation2 + $0x138] sm:$0xff]
    %v137 = vld [vmem:[#allocation2 + $0x140] sm:$0xff]
    %v138 = vld [vmem:[#allocation2 + $0x148] sm:$0xff]
    %v139 = vld [vmem:[#allocation2 + $0x150] sm:$0xff]
    %v140 = vld [vmem:[#allocation2 + $0x158] sm:$0xff]
    %v141 = vld [vmem:[#allocation2 + $0x160] sm:$0xff]
    %v142 = vld [vmem:[#allocation2 + $0x168] sm:$0xff]
    %v143 = vld [vmem:[#allocation2 + $0x170] sm:$0xff]
    %v144 = vld [vmem:[#allocation2 + $0x178] sm:$0xff]
    %v145 = vld [vmem:[#allocation2 + $0x180] sm:$0xff]
    %v146 = vld [vmem:[#allocation2 + $0x188] sm:$0xff]
    %v147 = vld [vmem:[#allocation2 + $0x190] sm:$0xff]
    %v148 = vld [vmem:[#allocation2 + $0x198] sm:$0xff]
    %v149 = vld [vmem:[#allocation2 + $0x1a0] sm:$0xff]
    %v150 = vld [vmem:[#allocation2 + $0x1a8] sm:$0xff]
    %v151 = vld [vmem:[#allocation2 + $0x1b0] sm:$0xff]
    %v152 = vld [vmem:[#allocation2 + $0x1b8] sm:$0xff]
    %v153 = vld [vmem:[#allocation2 + $0x1c0] sm:$0xff]
    %v154 = vld [vmem:[#allocation2 + $0x1c8] sm:$0xff]
    %v155 = vld [vmem:[#allocation2 + $0x1d0] sm:$0xff]
    %v156 = vld [vmem:[#allocation2 + $0x1d8] sm:$0xff]
    %v157 = vld [vmem:[#allocation2 + $0x1e0] sm:$0xff]
    %v158 = vld [vmem:[#allocation2 + $0x1e8] sm:$0xff]
    %v159 = vld [vmem:[#allocation2 + $0x1f0] sm:$0xff]
    %v160 = vld [vmem:[#allocation2 + $0x1f8] sm:$0xff]
    %v161 = vld [vmem:[#allocation4] sm:$0xf]
    %v163 = vlaneseq
    %v164 = vshrl.u32 %v163, 7
    %v165 = vsub.s32 0, %v164
    %v166 = vrot.slane %v161, %v165
    %v167 = vlaneseq
    %v168 = vshrl.u32 %v167, 7
    %v169 = vsub.s32 1, %v168
    %v170 = vrot.slane %v161, %v169
    %v171 = vlaneseq
    %v172 = vshrl.u32 %v171, 7
    %v173 = vsub.s32 2, %v172
    %v174 = vrot.slane %v161, %v173
    %v175 = vlaneseq
    %v176 = vshrl.u32 %v175, 7
    %v177 = vsub.s32 3, %v176
    %v178 = vrot.slane %v161, %v177
    %v247 = vunpack.c.l.b16 %v97
    %v248 = vunpack.c.h.b16 %v97
    %v249 = vunpack.c.l.b16 %v98
    %v250 = vunpack.c.h.b16 %v98
    %v251 = vunpack.c.l.b16 %v99
    %v252 = vunpack.c.h.b16 %v99
    %v253 = vunpack.c.l.b16 %v100
    %v254 = vunpack.c.h.b16 %v100
    %v255 = vunpack.c.l.b16 %v101
    %v256 = vunpack.c.h.b16 %v101
    %v257 = vunpack.c.l.b16 %v102
    %v258 = vunpack.c.h.b16 %v102
    %v259 = vunpack.c.l.b16 %v103
    %v260 = vunpack.c.h.b16 %v103
    %v261 = vunpack.c.l.b16 %v104
    %v262 = vunpack.c.h.b16 %v104
    %v263 = vunpack.c.l.b16 %v105
    %v264 = vunpack.c.h.b16 %v105
    %v265 = vunpack.c.l.b16 %v106
    %v266 = vunpack.c.h.b16 %v106
    %v267 = vunpack.c.l.b16 %v107
    %v268 = vunpack.c.h.b16 %v107
    %v269 = vunpack.c.l.b16 %v108
    %v270 = vunpack.c.h.b16 %v108
    %v271 = vunpack.c.l.b16 %v109
    %v272 = vunpack.c.h.b16 %v109
    %v273 = vunpack.c.l.b16 %v110
    %v274 = vunpack.c.h.b16 %v110
    %v275 = vunpack.c.l.b16 %v111
    %v276 = vunpack.c.h.b16 %v111
    %v277 = vunpack.c.l.b16 %v112
    %v278 = vunpack.c.h.b16 %v112
    %v279 = vunpack.c.l.b16 %v113
    %v280 = vunpack.c.h.b16 %v113
    %v281 = vunpack.c.l.b16 %v114
    %v282 = vunpack.c.h.b16 %v114
    %v283 = vunpack.c.l.b16 %v115
    %v284 = vunpack.c.h.b16 %v115
    %v285 = vunpack.c.l.b16 %v116
    %v286 = vunpack.c.h.b16 %v116
    %v287 = vunpack.c.l.b16 %v117
    %v288 = vunpack.c.h.b16 %v117
    %v289 = vunpack.c.l.b16 %v118
    %v290 = vunpack.c.h.b16 %v118
    %v291 = vunpack.c.l.b16 %v119
    %v292 = vunpack.c.h.b16 %v119
    %v293 = vunpack.c.l.b16 %v120
    %v294 = vunpack.c.h.b16 %v120
    %v295 = vunpack.c.l.b16 %v121
    %v296 = vunpack.c.h.b16 %v121
    %v297 = vunpack.c.l.b16 %v122
    %v298 = vunpack.c.h.b16 %v122
    %v299 = vunpack.c.l.b16 %v123
    %v300 = vunpack.c.h.b16 %v123
    %v301 = vunpack.c.l.b16 %v124
    %v302 = vunpack.c.h.b16 %v124
    %v303 = vunpack.c.l.b16 %v125
    %v304 = vunpack.c.h.b16 %v125
    %v305 = vunpack.c.l.b16 %v126
    %v306 = vunpack.c.h.b16 %v126
    %v307 = vunpack.c.l.b16 %v127
    %v308 = vunpack.c.h.b16 %v127
    %v309 = vunpack.c.l.b16 %v128
    %v310 = vunpack.c.h.b16 %v128
    %v311 = vunpack.c.l.b16 %v129
    %v312 = vunpack.c.h.b16 %v129
    %v313 = vunpack.c.l.b16 %v130
    %v314 = vunpack.c.h.b16 %v130
    %v315 = vunpack.c.l.b16 %v131
    %v316 = vunpack.c.h.b16 %v131
    %v317 = vunpack.c.l.b16 %v132
    %v318 = vunpack.c.h.b16 %v132
    %v319 = vunpack.c.l.b16 %v133
    %v320 = vunpack.c.h.b16 %v133
    %v321 = vunpack.c.l.b16 %v134
    %v322 = vunpack.c.h.b16 %v134
    %v323 = vunpack.c.l.b16 %v135
    %v324 = vunpack.c.h.b16 %v135
    %v325 = vunpack.c.l.b16 %v136
    %v326 = vunpack.c.h.b16 %v136
    %v327 = vunpack.c.l.b16 %v137
    %v328 = vunpack.c.h.b16 %v137
    %v329 = vunpack.c.l.b16 %v138
    %v330 = vunpack.c.h.b16 %v138
    %v331 = vunpack.c.l.b16 %v139
    %v332 = vunpack.c.h.b16 %v139
    %v333 = vunpack.c.l.b16 %v140
    %v334 = vunpack.c.h.b16 %v140
    %v335 = vunpack.c.l.b16 %v141
    %v336 = vunpack.c.h.b16 %v141
    %v337 = vunpack.c.l.b16 %v142
    %v338 = vunpack.c.h.b16 %v142
    %v339 = vunpack.c.l.b16 %v143
    %v340 = vunpack.c.h.b16 %v143
    %v341 = vunpack.c.l.b16 %v144
    %v342 = vunpack.c.h.b16 %v144
    %v343 = vunpack.c.l.b16 %v145
    %v344 = vunpack.c.h.b16 %v145
    %v345 = vunpack.c.l.b16 %v146
    %v346 = vunpack.c.h.b16 %v146
    %v347 = vunpack.c.l.b16 %v147
    %v348 = vunpack.c.h.b16 %v147
    %v349 = vunpack.c.l.b16 %v148
    %v350 = vunpack.c.h.b16 %v148
    %v351 = vunpack.c.l.b16 %v149
    %v352 = vunpack.c.h.b16 %v149
    %v353 = vunpack.c.l.b16 %v150
    %v354 = vunpack.c.h.b16 %v150
    %v355 = vunpack.c.l.b16 %v151
    %v356 = vunpack.c.h.b16 %v151
    %v357 = vunpack.c.l.b16 %v152
    %v358 = vunpack.c.h.b16 %v152
    %v359 = vunpack.c.l.b16 %v153
    %v360 = vunpack.c.h.b16 %v153
    %v361 = vunpack.c.l.b16 %v154
    %v362 = vunpack.c.h.b16 %v154
    %v363 = vunpack.c.l.b16 %v155
    %v364 = vunpack.c.h.b16 %v155
    %v365 = vunpack.c.l.b16 %v156
    %v366 = vunpack.c.h.b16 %v156
    %v367 = vunpack.c.l.b16 %v157
    %v368 = vunpack.c.h.b16 %v157
    %v369 = vunpack.c.l.b16 %v158
    %v370 = vunpack.c.h.b16 %v158
    %v371 = vunpack.c.l.b16 %v159
    %v372 = vunpack.c.h.b16 %v159
    %v373 = vunpack.c.l.b16 %v160
    %v374 = vunpack.c.h.b16 %v160
    %v375 = vpack.c.b16 %v251, %v247
    %v376 = vpack.c.b16 %v252, %v248
    %v377 = vpack.c.b16 %v253, %v249
    %v378 = vpack.c.b16 %v254, %v250
    %v379 = vpack.c.b16 %v259, %v255
    %v380 = vpack.c.b16 %v260, %v256
    %v381 = vpack.c.b16 %v261, %v257
    %v382 = vpack.c.b16 %v262, %v258
    %v383 = vpack.c.b16 %v267, %v263
    %v384 = vpack.c.b16 %v268, %v264
    %v385 = vpack.c.b16 %v269, %v265
    %v386 = vpack.c.b16 %v270, %v266
    %v387 = vpack.c.b16 %v275, %v271
    %v388 = vpack.c.b16 %v276, %v272
    %v389 = vpack.c.b16 %v277, %v273
    %v390 = vpack.c.b16 %v278, %v274
    %v391 = vpack.c.b16 %v283, %v279
    %v392 = vpack.c.b16 %v284, %v280
    %v393 = vpack.c.b16 %v285, %v281
    %v394 = vpack.c.b16 %v286, %v282
    %v395 = vpack.c.b16 %v291, %v287
    %v396 = vpack.c.b16 %v292, %v288
    %v397 = vpack.c.b16 %v293, %v289
    %v398 = vpack.c.b16 %v294, %v290
    %v399 = vpack.c.b16 %v299, %v295
    %v400 = vpack.c.b16 %v300, %v296
    %v401 = vpack.c.b16 %v301, %v297
    %v402 = vpack.c.b16 %v302, %v298
    %v403 = vpack.c.b16 %v307, %v303
    %v404 = vpack.c.b16 %v308, %v304
    %v405 = vpack.c.b16 %v309, %v305
    %v406 = vpack.c.b16 %v310, %v306
    %v407 = vpack.c.b16 %v315, %v311
    %v408 = vpack.c.b16 %v316, %v312
    %v409 = vpack.c.b16 %v317, %v313
    %v410 = vpack.c.b16 %v318, %v314
    %v411 = vpack.c.b16 %v323, %v319
    %v412 = vpack.c.b16 %v324, %v320
    %v413 = vpack.c.b16 %v325, %v321
    %v414 = vpack.c.b16 %v326, %v322
    %v415 = vpack.c.b16 %v331, %v327
    %v416 = vpack.c.b16 %v332, %v328
    %v417 = vpack.c.b16 %v333, %v329
    %v418 = vpack.c.b16 %v334, %v330
    %v419 = vpack.c.b16 %v339, %v335
    %v420 = vpack.c.b16 %v340, %v336
    %v421 = vpack.c.b16 %v341, %v337
    %v422 = vpack.c.b16 %v342, %v338
    %v423 = vpack.c.b16 %v347, %v343
    %v424 = vpack.c.b16 %v348, %v344
    %v425 = vpack.c.b16 %v349, %v345
    %v426 = vpack.c.b16 %v350, %v346
    %v427 = vpack.c.b16 %v355, %v351
    %v428 = vpack.c.b16 %v356, %v352
    %v429 = vpack.c.b16 %v357, %v353
    %v430 = vpack.c.b16 %v358, %v354
    %v431 = vpack.c.b16 %v363, %v359
    %v432 = vpack.c.b16 %v364, %v360
    %v433 = vpack.c.b16 %v365, %v361
    %v434 = vpack.c.b16 %v366, %v362
    %v435 = vpack.c.b16 %v371, %v367
    %v436 = vpack.c.b16 %v372, %v368
    %v437 = vpack.c.b16 %v373, %v369
    %v438 = vpack.c.b16 %v374, %v370
    %503 = vmatprep.subr.bf16.mxu0 %v404
    %504 = vmatpush1.bf16.msra.mxu0 %v403
    %505 = vmatprep.subr.bf16.mxu0 %v400
    %506 = vmatpush1.bf16.msra.mxu0 %v399
    %507 = vmatprep.subr.bf16.mxu0 %v396
    %508 = vmatpush1.bf16.msra.mxu0 %v395
    %509 = vmatprep.subr.bf16.mxu0 %v392
    %510 = vmatpush1.bf16.msra.mxu0 %v391
    %511 = vmatprep.subr.bf16.mxu0 %v388
    %512 = vmatpush1.bf16.msra.mxu0 %v387
    %513 = vmatprep.subr.bf16.mxu0 %v384
    %514 = vmatpush1.bf16.msra.mxu0 %v383
    %515 = vmatprep.subr.bf16.mxu0 %v380
    %516 = vmatpush1.bf16.msra.mxu0 %v379
    %517 = vmatprep.subr.bf16.mxu0 %v376
    %518 = vmatpush1.bf16.msra.mxu0 %v375
    %519 = vmatprep.subr.bf16.mxu0 %v436
    %520 = vmatpush2.bf16.msra.mxu0 %v435
    %521 = vmatprep.subr.bf16.mxu0 %v432
    %522 = vmatpush2.bf16.msra.mxu0 %v431
    %523 = vmatprep.subr.bf16.mxu0 %v428
    %524 = vmatpush2.bf16.msra.mxu0 %v427
    %525 = vmatprep.subr.bf16.mxu0 %v424
    %526 = vmatpush2.bf16.msra.mxu0 %v423
    %527 = vmatprep.subr.bf16.mxu0 %v420
    %528 = vmatpush2.bf16.msra.mxu0 %v419
    %529 = vmatprep.subr.bf16.mxu0 %v416
    %530 = vmatpush2.bf16.msra.mxu0 %v415
    %531 = vmatprep.subr.bf16.mxu0 %v412
    %532 = vmatpush2.bf16.msra.mxu0 %v411
    %533 = vmatprep.subr.bf16.mxu0 %v408
    %534 = vmatpush2.bf16.msra.mxu0 %v407
    %535 = vmatprep.mubr.bf16.mxu0 %v96
    %536 = vmatmul.mubr.bf16.gmra.mxu0 %v95
    %v537 = vpop.f32.mrf.mxu0
    %v538 = vadd.f32 %v166, %v537
    %v539 = vpop.f32.mrf.mxu0
    %v540 = vadd.f32 %v170, %v539
    %v541 = vpop.f32.mrf.mxu0
    %v542 = vpop.f32.mrf.mxu0
    %543 = vdwg.mxu0
    %544 = vmatprep.subr.bf16.mxu0 %v406
    %545 = vmatpush1.bf16.msra.mxu0 %v405
    %546 = vmatprep.subr.bf16.mxu0 %v402
    %547 = vmatpush1.bf16.msra.mxu0 %v401
    %548 = vmatprep.subr.bf16.mxu0 %v398
    %549 = vmatpush1.bf16.msra.mxu0 %v397
    %550 = vmatprep.subr.bf16.mxu0 %v394
    %551 = vmatpush1.bf16.msra.mxu0 %v393
    %552 = vmatprep.subr.bf16.mxu0 %v390
    %553 = vmatpush1.bf16.msra.mxu0 %v389
    %554 = vmatprep.subr.bf16.mxu0 %v386
    %555 = vmatpush1.bf16.msra.mxu0 %v385
    %556 = vmatprep.subr.bf16.mxu0 %v382
    %557 = vmatpush1.bf16.msra.mxu0 %v381
    %558 = vmatprep.subr.bf16.mxu0 %v378
    %559 = vmatpush1.bf16.msra.mxu0 %v377
    %560 = vmatprep.subr.bf16.mxu0 %v438
    %561 = vmatpush2.bf16.msra.mxu0 %v437
    %562 = vmatprep.subr.bf16.mxu0 %v434
    %563 = vmatpush2.bf16.msra.mxu0 %v433
    %564 = vmatprep.subr.bf16.mxu0 %v430
    %565 = vmatpush2.bf16.msra.mxu0 %v429
    %566 = vmatprep.subr.bf16.mxu0 %v426
    %567 = vmatpush2.bf16.msra.mxu0 %v425
    %568 = vmatprep.subr.bf16.mxu0 %v422
    %569 = vmatpush2.bf16.msra.mxu0 %v421
    %570 = vmatprep.subr.bf16.mxu0 %v418
    %571 = vmatpush2.bf16.msra.mxu0 %v417
    %572 = vmatprep.subr.bf16.mxu0 %v414
    %573 = vmatpush2.bf16.msra.mxu0 %v413
    %574 = vmatprep.subr.bf16.mxu0 %v410
    %575 = vmatpush2.bf16.msra.mxu0 %v409
    %576 = vmatprep.mubr.bf16.mxu0 %v96
    %577 = vmatmul.mubr.bf16.gmra.mxu0 %v95
    %v578 = vpop.f32.mrf.mxu0
    %v579 = vadd.f32 %v174, %v578
    %v580 = vpop.f32.mrf.mxu0
    %v581 = vadd.f32 %v178, %v580
    %v582 = vpop.f32.mrf.mxu0
    %v583 = vpop.f32.mrf.mxu0
    %584 = vdwg.mxu0
    %v585 = vmax.f32 %v538, 0.0
    %v586 = vmax.f32 %v540, 0.0
    %v587 = vmax.f32 %v579, 0.0
    %v588 = vmax.f32 %v581, 0.0
    %v589 = vpack.c.bf16 %v585, %v585
    %v590 = vpack.c.bf16 %v586, %v586
    %v591 = vpack.c.bf16 %v587, %v587
    %v592 = vpack.c.bf16 %v588, %v588
    %v593 = vld [vmem:[#allocation6] sm:$0xff]
    %v594 = vld [vmem:[#allocation6 + $0x8] sm:$0xff]
    %v595 = vld [vmem:[#allocation6 + $0x10] sm:$0xff]
    %v596 = vld [vmem:[#allocation6 + $0x18] sm:$0xff]
    %v597 = vld [vmem:[#allocation6 + $0x20] sm:$0xff]
    %v598 = vld [vmem:[#allocation6 + $0x28] sm:$0xff]
    %v599 = vld [vmem:[#allocation6 + $0x30] sm:$0xff]
    %v600 = vld [vmem:[#allocation6 + $0x38] sm:$0xff]
    %v601 = vld [vmem:[#allocation6 + $0x40] sm:$0xff]
    %v602 = vld [vmem:[#allocation6 + $0x48] sm:$0xff]
    %v603 = vld [vmem:[#allocation6 + $0x50] sm:$0xff]
    %v604 = vld [vmem:[#allocation6 + $0x58] sm:$0xff]
    %v605 = vld [vmem:[#allocation6 + $0x60] sm:$0xff]
    %v606 = vld [vmem:[#allocation6 + $0x68] sm:$0xff]
    %v607 = vld [vmem:[#allocation6 + $0x70] sm:$0xff]
    %v608 = vld [vmem:[#allocation6 + $0x78] sm:$0xff]
    %v609 = vld [vmem:[#allocation6 + $0x80] sm:$0xff]
    %v610 = vld [vmem:[#allocation6 + $0x88] sm:$0xff]
    %v611 = vld [vmem:[#allocation6 + $0x90] sm:$0xff]
    %v612 = vld [vmem:[#allocation6 + $0x98] sm:$0xff]
    %v613 = vld [vmem:[#allocation6 + $0xa0] sm:$0xff]
    %v614 = vld [vmem:[#allocation6 + $0xa8] sm:$0xff]
    %v615 = vld [vmem:[#allocation6 + $0xb0] sm:$0xff]
    %v616 = vld [vmem:[#allocation6 + $0xb8] sm:$0xff]
    %v617 = vld [vmem:[#allocation6 + $0xc0] sm:$0xff]
    %v618 = vld [vmem:[#allocation6 + $0xc8] sm:$0xff]
    %v619 = vld [vmem:[#allocation6 + $0xd0] sm:$0xff]
    %v620 = vld [vmem:[#allocation6 + $0xd8] sm:$0xff]
    %v621 = vld [vmem:[#allocation6 + $0xe0] sm:$0xff]
    %v622 = vld [vmem:[#allocation6 + $0xe8] sm:$0xff]
    %v623 = vld [vmem:[#allocation6 + $0xf0] sm:$0xff]
    %v624 = vld [vmem:[#allocation6 + $0xf8] sm:$0xff]
    %v625 = vld [vmem:[#allocation6 + $0x100] sm:$0xff]
    %v626 = vld [vmem:[#allocation6 + $0x108] sm:$0xff]
    %v627 = vld [vmem:[#allocation6 + $0x110] sm:$0xff]
    %v628 = vld [vmem:[#allocation6 + $0x118] sm:$0xff]
    %v629 = vld [vmem:[#allocation6 + $0x120] sm:$0xff]
    %v630 = vld [vmem:[#allocation6 + $0x128] sm:$0xff]
    %v631 = vld [vmem:[#allocation6 + $0x130] sm:$0xff]
    %v632 = vld [vmem:[#allocation6 + $0x138] sm:$0xff]
    %v633 = vld [vmem:[#allocation6 + $0x140] sm:$0xff]
    %v634 = vld [vmem:[#allocation6 + $0x148] sm:$0xff]
    %v635 = vld [vmem:[#allocation6 + $0x150] sm:$0xff]
    %v636 = vld [vmem:[#allocation6 + $0x158] sm:$0xff]
    %v637 = vld [vmem:[#allocation6 + $0x160] sm:$0xff]
    %v638 = vld [vmem:[#allocation6 + $0x168] sm:$0xff]
    %v639 = vld [vmem:[#allocation6 + $0x170] sm:$0xff]
    %v640 = vld [vmem:[#allocation6 + $0x178] sm:$0xff]
    %v641 = vld [vmem:[#allocation6 + $0x180] sm:$0xff]
    %v642 = vld [vmem:[#allocation6 + $0x188] sm:$0xff]
    %v643 = vld [vmem:[#allocation6 + $0x190] sm:$0xff]
    %v644 = vld [vmem:[#allocation6 + $0x198] sm:$0xff]
    %v645 = vld [vmem:[#allocation6 + $0x1a0] sm:$0xff]
    %v646 = vld [vmem:[#allocation6 + $0x1a8] sm:$0xff]
    %v647 = vld [vmem:[#allocation6 + $0x1b0] sm:$0xff]
    %v648 = vld [vmem:[#allocation6 + $0x1b8] sm:$0xff]
    %v649 = vld [vmem:[#allocation6 + $0x1c0] sm:$0xff]
    %v650 = vld [vmem:[#allocation6 + $0x1c8] sm:$0xff]
    %v651 = vld [vmem:[#allocation6 + $0x1d0] sm:$0xff]
    %v652 = vld [vmem:[#allocation6 + $0x1d8] sm:$0xff]
    %v653 = vld [vmem:[#allocation6 + $0x1e0] sm:$0xff]
    %v654 = vld [vmem:[#allocation6 + $0x1e8] sm:$0xff]
    %v655 = vld [vmem:[#allocation6 + $0x1f0] sm:$0xff]
    %v656 = vld [vmem:[#allocation6 + $0x1f8] sm:$0xff]
    %v657 = vld [vmem:[#allocation6 + $0x200] sm:$0xff]
    %v658 = vld [vmem:[#allocation6 + $0x208] sm:$0xff]
    %v659 = vld [vmem:[#allocation6 + $0x210] sm:$0xff]
    %v660 = vld [vmem:[#allocation6 + $0x218] sm:$0xff]
    %v661 = vld [vmem:[#allocation6 + $0x220] sm:$0xff]
    %v662 = vld [vmem:[#allocation6 + $0x228] sm:$0xff]
    %v663 = vld [vmem:[#allocation6 + $0x230] sm:$0xff]
    %v664 = vld [vmem:[#allocation6 + $0x238] sm:$0xff]
    %v665 = vld [vmem:[#allocation6 + $0x240] sm:$0xff]
    %v666 = vld [vmem:[#allocation6 + $0x248] sm:$0xff]
    %v667 = vld [vmem:[#allocation6 + $0x250] sm:$0xff]
    %v668 = vld [vmem:[#allocation6 + $0x258] sm:$0xff]
    %v669 = vld [vmem:[#allocation6 + $0x260] sm:$0xff]
    %v670 = vld [vmem:[#allocation6 + $0x268] sm:$0xff]
    %v671 = vld [vmem:[#allocation6 + $0x270] sm:$0xff]
    %v672 = vld [vmem:[#allocation6 + $0x278] sm:$0xff]
    %v673 = vld [vmem:[#allocation6 + $0x280] sm:$0xff]
    %v674 = vld [vmem:[#allocation6 + $0x288] sm:$0xff]
    %v675 = vld [vmem:[#allocation6 + $0x290] sm:$0xff]
    %v676 = vld [vmem:[#allocation6 + $0x298] sm:$0xff]
    %v677 = vld [vmem:[#allocation6 + $0x2a0] sm:$0xff]
    %v678 = vld [vmem:[#allocation6 + $0x2a8] sm:$0xff]
    %v679 = vld [vmem:[#allocation6 + $0x2b0] sm:$0xff]
    %v680 = vld [vmem:[#allocation6 + $0x2b8] sm:$0xff]
    %v681 = vld [vmem:[#allocation6 + $0x2c0] sm:$0xff]
    %v682 = vld [vmem:[#allocation6 + $0x2c8] sm:$0xff]
    %v683 = vld [vmem:[#allocation6 + $0x2d0] sm:$0xff]
    %v684 = vld [vmem:[#allocation6 + $0x2d8] sm:$0xff]
    %v685 = vld [vmem:[#allocation6 + $0x2e0] sm:$0xff]
    %v686 = vld [vmem:[#allocation6 + $0x2e8] sm:$0xff]
    %v687 = vld [vmem:[#allocation6 + $0x2f0] sm:$0xff]
    %v688 = vld [vmem:[#allocation6 + $0x2f8] sm:$0xff]
    %v689 = vld [vmem:[#allocation6 + $0x300] sm:$0xff]
    %v690 = vld [vmem:[#allocation6 + $0x308] sm:$0xff]
    %v691 = vld [vmem:[#allocation6 + $0x310] sm:$0xff]
    %v692 = vld [vmem:[#allocation6 + $0x318] sm:$0xff]
    %v693 = vld [vmem:[#allocation6 + $0x320] sm:$0xff]
    %v694 = vld [vmem:[#allocation6 + $0x328] sm:$0xff]
    %v695 = vld [vmem:[#allocation6 + $0x330] sm:$0xff]
    %v696 = vld [vmem:[#allocation6 + $0x338] sm:$0xff]
    %v697 = vld [vmem:[#allocation6 + $0x340] sm:$0xff]
    %v698 = vld [vmem:[#allocation6 + $0x348] sm:$0xff]
    %v699 = vld [vmem:[#allocation6 + $0x350] sm:$0xff]
    %v700 = vld [vmem:[#allocation6 + $0x358] sm:$0xff]
    %v701 = vld [vmem:[#allocation6 + $0x360] sm:$0xff]
    %v702 = vld [vmem:[#allocation6 + $0x368] sm:$0xff]
    %v703 = vld [vmem:[#allocation6 + $0x370] sm:$0xff]
    %v704 = vld [vmem:[#allocation6 + $0x378] sm:$0xff]
    %v705 = vld [vmem:[#allocation6 + $0x380] sm:$0xff]
    %v706 = vld [vmem:[#allocation6 + $0x388] sm:$0xff]
    %v707 = vld [vmem:[#allocation6 + $0x390] sm:$0xff]
    %v708 = vld [vmem:[#allocation6 + $0x398] sm:$0xff]
    %v709 = vld [vmem:[#allocation6 + $0x3a0] sm:$0xff]
    %v710 = vld [vmem:[#allocation6 + $0x3a8] sm:$0xff]
    %v711 = vld [vmem:[#allocation6 + $0x3b0] sm:$0xff]
    %v712 = vld [vmem:[#allocation6 + $0x3b8] sm:$0xff]
    %v713 = vld [vmem:[#allocation6 + $0x3c0] sm:$0xff]
    %v714 = vld [vmem:[#allocation6 + $0x3c8] sm:$0xff]
    %v715 = vld [vmem:[#allocation6 + $0x3d0] sm:$0xff]
    %v716 = vld [vmem:[#allocation6 + $0x3d8] sm:$0xff]
    %v717 = vld [vmem:[#allocation6 + $0x3e0] sm:$0xff]
    %v718 = vld [vmem:[#allocation6 + $0x3e8] sm:$0xff]
    %v719 = vld [vmem:[#allocation6 + $0x3f0] sm:$0xff]
    %v720 = vld [vmem:[#allocation6 + $0x3f8] sm:$0xff]
    %v849 = vunpack.c.l.b16 %v593
    %v850 = vunpack.c.h.b16 %v593
    %v851 = vunpack.c.l.b16 %v594
    %v852 = vunpack.c.h.b16 %v594
    %v853 = vunpack.c.l.b16 %v595
    %v854 = vunpack.c.h.b16 %v595
    %v855 = vunpack.c.l.b16 %v596
    %v856 = vunpack.c.h.b16 %v596
    %v857 = vunpack.c.l.b16 %v597
    %v858 = vunpack.c.h.b16 %v597
    %v859 = vunpack.c.l.b16 %v598
    %v860 = vunpack.c.h.b16 %v598
    %v861 = vunpack.c.l.b16 %v599
    %v862 = vunpack.c.h.b16 %v599
    %v863 = vunpack.c.l.b16 %v600
    %v864 = vunpack.c.h.b16 %v600
    %v865 = vunpack.c.l.b16 %v601
    %v866 = vunpack.c.h.b16 %v601
    %v867 = vunpack.c.l.b16 %v602
    %v868 = vunpack.c.h.b16 %v602
    %v869 = vunpack.c.l.b16 %v603
    %v870 = vunpack.c.h.b16 %v603
    %v871 = vunpack.c.l.b16 %v604
    %v872 = vunpack.c.h.b16 %v604
    %v873 = vunpack.c.l.b16 %v605
    %v874 = vunpack.c.h.b16 %v605
    %v875 = vunpack.c.l.b16 %v606
    %v876 = vunpack.c.h.b16 %v606
    %v877 = vunpack.c.l.b16 %v607
    %v878 = vunpack.c.h.b16 %v607
    %v879 = vunpack.c.l.b16 %v608
    %v880 = vunpack.c.h.b16 %v608
    %v881 = vunpack.c.l.b16 %v609
    %v882 = vunpack.c.h.b16 %v609
    %v883 = vunpack.c.l.b16 %v610
    %v884 = vunpack.c.h.b16 %v610
    %v885 = vunpack.c.l.b16 %v611
    %v886 = vunpack.c.h.b16 %v611
    %v887 = vunpack.c.l.b16 %v612
    %v888 = vunpack.c.h.b16 %v612
    %v889 = vunpack.c.l.b16 %v613
    %v890 = vunpack.c.h.b16 %v613
    %v891 = vunpack.c.l.b16 %v614
    %v892 = vunpack.c.h.b16 %v614
    %v893 = vunpack.c.l.b16 %v615
    %v894 = vunpack.c.h.b16 %v615
    %v895 = vunpack.c.l.b16 %v616
    %v896 = vunpack.c.h.b16 %v616
    %v897 = vunpack.c.l.b16 %v617
    %v898 = vunpack.c.h.b16 %v617
    %v899 = vunpack.c.l.b16 %v618
    %v900 = vunpack.c.h.b16 %v618
    %v901 = vunpack.c.l.b16 %v619
    %v902 = vunpack.c.h.b16 %v619
    %v903 = vunpack.c.l.b16 %v620
    %v904 = vunpack.c.h.b16 %v620
    %v905 = vunpack.c.l.b16 %v621
    %v906 = vunpack.c.h.b16 %v621
    %v907 = vunpack.c.l.b16 %v622
    %v908 = vunpack.c.h.b16 %v622
    %v909 = vunpack.c.l.b16 %v623
    %v910 = vunpack.c.h.b16 %v623
    %v911 = vunpack.c.l.b16 %v624
    %v912 = vunpack.c.h.b16 %v624
    %v913 = vunpack.c.l.b16 %v625
    %v914 = vunpack.c.h.b16 %v625
    %v915 = vunpack.c.l.b16 %v626
    %v916 = vunpack.c.h.b16 %v626
    %v917 = vunpack.c.l.b16 %v627
    %v918 = vunpack.c.h.b16 %v627
    %v919 = vunpack.c.l.b16 %v628
    %v920 = vunpack.c.h.b16 %v628
    %v921 = vunpack.c.l.b16 %v629
    %v922 = vunpack.c.h.b16 %v629
    %v923 = vunpack.c.l.b16 %v630
    %v924 = vunpack.c.h.b16 %v630
    %v925 = vunpack.c.l.b16 %v631
    %v926 = vunpack.c.h.b16 %v631
    %v927 = vunpack.c.l.b16 %v632
    %v928 = vunpack.c.h.b16 %v632
    %v929 = vunpack.c.l.b16 %v633
    %v930 = vunpack.c.h.b16 %v633
    %v931 = vunpack.c.l.b16 %v634
    %v932 = vunpack.c.h.b16 %v634
    %v933 = vunpack.c.l.b16 %v635
    %v934 = vunpack.c.h.b16 %v635
    %v935 = vunpack.c.l.b16 %v636
    %v936 = vunpack.c.h.b16 %v636
    %v937 = vunpack.c.l.b16 %v637
    %v938 = vunpack.c.h.b16 %v637
    %v939 = vunpack.c.l.b16 %v638
    %v940 = vunpack.c.h.b16 %v638
    %v941 = vunpack.c.l.b16 %v639
    %v942 = vunpack.c.h.b16 %v639
    %v943 = vunpack.c.l.b16 %v640
    %v944 = vunpack.c.h.b16 %v640
    %v945 = vunpack.c.l.b16 %v641
    %v946 = vunpack.c.h.b16 %v641
    %v947 = vunpack.c.l.b16 %v642
    %v948 = vunpack.c.h.b16 %v642
    %v949 = vunpack.c.l.b16 %v643
    %v950 = vunpack.c.h.b16 %v643
    %v951 = vunpack.c.l.b16 %v644
    %v952 = vunpack.c.h.b16 %v644
    %v953 = vunpack.c.l.b16 %v645
    %v954 = vunpack.c.h.b16 %v645
    %v955 = vunpack.c.l.b16 %v646
    %v956 = vunpack.c.h.b16 %v646
    %v957 = vunpack.c.l.b16 %v647
    %v958 = vunpack.c.h.b16 %v647
    %v959 = vunpack.c.l.b16 %v648
    %v960 = vunpack.c.h.b16 %v648
    %v961 = vunpack.c.l.b16 %v649
    %v962 = vunpack.c.h.b16 %v649
    %v963 = vunpack.c.l.b16 %v650
    %v964 = vunpack.c.h.b16 %v650
    %v965 = vunpack.c.l.b16 %v651
    %v966 = vunpack.c.h.b16 %v651
    %v967 = vunpack.c.l.b16 %v652
    %v968 = vunpack.c.h.b16 %v652
    %v969 = vunpack.c.l.b16 %v653
    %v970 = vunpack.c.h.b16 %v653
    %v971 = vunpack.c.l.b16 %v654
    %v972 = vunpack.c.h.b16 %v654
    %v973 = vunpack.c.l.b16 %v655
    %v974 = vunpack.c.h.b16 %v655
    %v975 = vunpack.c.l.b16 %v656
    %v976 = vunpack.c.h.b16 %v656
    %v977 = vunpack.c.l.b16 %v657
    %v978 = vunpack.c.h.b16 %v657
    %v979 = vunpack.c.l.b16 %v658
    %v980 = vunpack.c.h.b16 %v658
    %v981 = vunpack.c.l.b16 %v659
    %v982 = vunpack.c.h.b16 %v659
    %v983 = vunpack.c.l.b16 %v660
    %v984 = vunpack.c.h.b16 %v660
    %v985 = vunpack.c.l.b16 %v661
    %v986 = vunpack.c.h.b16 %v661
    %v987 = vunpack.c.l.b16 %v662
    %v988 = vunpack.c.h.b16 %v662
    %v989 = vunpack.c.l.b16 %v663
    %v990 = vunpack.c.h.b16 %v663
    %v991 = vunpack.c.l.b16 %v664
    %v992 = vunpack.c.h.b16 %v664
    %v993 = vunpack.c.l.b16 %v665
    %v994 = vunpack.c.h.b16 %v665
    %v995 = vunpack.c.l.b16 %v666
    %v996 = vunpack.c.h.b16 %v666
    %v997 = vunpack.c.l.b16 %v667
    %v998 = vunpack.c.h.b16 %v667
    %v999 = vunpack.c.l.b16 %v668
    %v1000 = vunpack.c.h.b16 %v668
    %v1001 = vunpack.c.l.b16 %v669
    %v1002 = vunpack.c.h.b16 %v669
    %v1003 = vunpack.c.l.b16 %v670
    %v1004 = vunpack.c.h.b16 %v670
    %v1005 = vunpack.c.l.b16 %v671
    %v1006 = vunpack.c.h.b16 %v671
    %v1007 = vunpack.c.l.b16 %v672
    %v1008 = vunpack.c.h.b16 %v672
    %v1009 = vunpack.c.l.b16 %v673
    %v1010 = vunpack.c.h.b16 %v673
    %v1011 = vunpack.c.l.b16 %v674
    %v1012 = vunpack.c.h.b16 %v674
    %v1013 = vunpack.c.l.b16 %v675
    %v1014 = vunpack.c.h.b16 %v675
    %v1015 = vunpack.c.l.b16 %v676
    %v1016 = vunpack.c.h.b16 %v676
    %v1017 = vunpack.c.l.b16 %v677
    %v1018 = vunpack.c.h.b16 %v677
    %v1019 = vunpack.c.l.b16 %v678
    %v1020 = vunpack.c.h.b16 %v678
    %v1021 = vunpack.c.l.b16 %v679
    %v1022 = vunpack.c.h.b16 %v679
    %v1023 = vunpack.c.l.b16 %v680
    %v1024 = vunpack.c.h.b16 %v680
    %v1025 = vunpack.c.l.b16 %v681
    %v1026 = vunpack.c.h.b16 %v681
    %v1027 = vunpack.c.l.b16 %v682
    %v1028 = vunpack.c.h.b16 %v682
    %v1029 = vunpack.c.l.b16 %v683
    %v1030 = vunpack.c.h.b16 %v683
    %v1031 = vunpack.c.l.b16 %v684
    %v1032 = vunpack.c.h.b16 %v684
    %v1033 = vunpack.c.l.b16 %v685
    %v1034 = vunpack.c.h.b16 %v685
    %v1035 = vunpack.c.l.b16 %v686
    %v1036 = vunpack.c.h.b16 %v686
    %v1037 = vunpack.c.l.b16 %v687
    %v1038 = vunpack.c.h.b16 %v687
    %v1039 = vunpack.c.l.b16 %v688
    %v1040 = vunpack.c.h.b16 %v688
    %v1041 = vunpack.c.l.b16 %v689
    %v1042 = vunpack.c.h.b16 %v689
    %v1043 = vunpack.c.l.b16 %v690
    %v1044 = vunpack.c.h.b16 %v690
    %v1045 = vunpack.c.l.b16 %v691
    %v1046 = vunpack.c.h.b16 %v691
    %v1047 = vunpack.c.l.b16 %v692
    %v1048 = vunpack.c.h.b16 %v692
    %v1049 = vunpack.c.l.b16 %v693
    %v1050 = vunpack.c.h.b16 %v693
    %v1051 = vunpack.c.l.b16 %v694
    %v1052 = vunpack.c.h.b16 %v694
    %v1053 = vunpack.c.l.b16 %v695
    %v1054 = vunpack.c.h.b16 %v695
    %v1055 = vunpack.c.l.b16 %v696
    %v1056 = vunpack.c.h.b16 %v696
    %v1057 = vunpack.c.l.b16 %v697
    %v1058 = vunpack.c.h.b16 %v697
    %v1059 = vunpack.c.l.b16 %v698
    %v1060 = vunpack.c.h.b16 %v698
    %v1061 = vunpack.c.l.b16 %v699
    %v1062 = vunpack.c.h.b16 %v699
    %v1063 = vunpack.c.l.b16 %v700
    %v1064 = vunpack.c.h.b16 %v700
    %v1065 = vunpack.c.l.b16 %v701
    %v1066 = vunpack.c.h.b16 %v701
    %v1067 = vunpack.c.l.b16 %v702
    %v1068 = vunpack.c.h.b16 %v702
    %v1069 = vunpack.c.l.b16 %v703
    %v1070 = vunpack.c.h.b16 %v703
    %v1071 = vunpack.c.l.b16 %v704
    %v1072 = vunpack.c.h.b16 %v704
    %v1073 = vunpack.c.l.b16 %v705
    %v1074 = vunpack.c.h.b16 %v705
    %v1075 = vunpack.c.l.b16 %v706
    %v1076 = vunpack.c.h.b16 %v706
    %v1077 = vunpack.c.l.b16 %v707
    %v1078 = vunpack.c.h.b16 %v707
    %v1079 = vunpack.c.l.b16 %v708
    %v1080 = vunpack.c.h.b16 %v708
    %v1081 = vunpack.c.l.b16 %v709
    %v1082 = vunpack.c.h.b16 %v709
    %v1083 = vunpack.c.l.b16 %v710
    %v1084 = vunpack.c.h.b16 %v710
    %v1085 = vunpack.c.l.b16 %v711
    %v1086 = vunpack.c.h.b16 %v711
    %v1087 = vunpack.c.l.b16 %v712
    %v1088 = vunpack.c.h.b16 %v712
    %v1089 = vunpack.c.l.b16 %v713
    %v1090 = vunpack.c.h.b16 %v713
    %v1091 = vunpack.c.l.b16 %v714
    %v1092 = vunpack.c.h.b16 %v714
    %v1093 = vunpack.c.l.b16 %v715
    %v1094 = vunpack.c.h.b16 %v715
    %v1095 = vunpack.c.l.b16 %v716
    %v1096 = vunpack.c.h.b16 %v716
    %v1097 = vunpack.c.l.b16 %v717
    %v1098 = vunpack.c.h.b16 %v717
    %v1099 = vunpack.c.l.b16 %v718
    %v1100 = vunpack.c.h.b16 %v718
    %v1101 = vunpack.c.l.b16 %v719
    %v1102 = vunpack.c.h.b16 %v719
    %v1103 = vunpack.c.l.b16 %v720
    %v1104 = vunpack.c.h.b16 %v720
    %v1105 = vpack.c.b16 %v853, %v849
    %v1106 = vpack.c.b16 %v854, %v850
    %v1107 = vpack.c.b16 %v855, %v851
    %v1108 = vpack.c.b16 %v856, %v852
    %v1109 = vpack.c.b16 %v861, %v857
    %v1110 = vpack.c.b16 %v862, %v858
    %v1111 = vpack.c.b16 %v863, %v859
    %v1112 = vpack.c.b16 %v864, %v860
    %v1113 = vpack.c.b16 %v869, %v865
    %v1114 = vpack.c.b16 %v870, %v866
    %v1115 = vpack.c.b16 %v871, %v867
    %v1116 = vpack.c.b16 %v872, %v868
    %v1117 = vpack.c.b16 %v877, %v873
    %v1118 = vpack.c.b16 %v878, %v874
    %v1119 = vpack.c.b16 %v879, %v875
    %v1120 = vpack.c.b16 %v880, %v876
    %v1121 = vpack.c.b16 %v885, %v881
    %v1122 = vpack.c.b16 %v886, %v882
    %v1123 = vpack.c.b16 %v887, %v883
    %v1124 = vpack.c.b16 %v888, %v884
    %v1125 = vpack.c.b16 %v893, %v889
    %v1126 = vpack.c.b16 %v894, %v890
    %v1127 = vpack.c.b16 %v895, %v891
    %v1128 = vpack.c.b16 %v896, %v892
    %v1129 = vpack.c.b16 %v901, %v897
    %v1130 = vpack.c.b16 %v902, %v898
    %v1131 = vpack.c.b16 %v903, %v899
    %v1132 = vpack.c.b16 %v904, %v900
    %v1133 = vpack.c.b16 %v909, %v905
    %v1134 = vpack.c.b16 %v910, %v906
    %v1135 = vpack.c.b16 %v911, %v907
    %v1136 = vpack.c.b16 %v912, %v908
    %v1137 = vpack.c.b16 %v917, %v913
    %v1138 = vpack.c.b16 %v918, %v914
    %v1139 = vpack.c.b16 %v919, %v915
    %v1140 = vpack.c.b16 %v920, %v916
    %v1141 = vpack.c.b16 %v925, %v921
    %v1142 = vpack.c.b16 %v926, %v922
    %v1143 = vpack.c.b16 %v927, %v923
    %v1144 = vpack.c.b16 %v928, %v924
    %v1145 = vpack.c.b16 %v933, %v929
    %v1146 = vpack.c.b16 %v934, %v930
    %v1147 = vpack.c.b16 %v935, %v931
    %v1148 = vpack.c.b16 %v936, %v932
    %v1149 = vpack.c.b16 %v941, %v937
    %v1150 = vpack.c.b16 %v942, %v938
    %v1151 = vpack.c.b16 %v943, %v939
    %v1152 = vpack.c.b16 %v944, %v940
    %v1153 = vpack.c.b16 %v949, %v945
    %v1154 = vpack.c.b16 %v950, %v946
    %v1155 = vpack.c.b16 %v951, %v947
    %v1156 = vpack.c.b16 %v952, %v948
    %v1157 = vpack.c.b16 %v957, %v953
    %v1158 = vpack.c.b16 %v958, %v954
    %v1159 = vpack.c.b16 %v959, %v955
    %v1160 = vpack.c.b16 %v960, %v956
    %v1161 = vpack.c.b16 %v965, %v961
    %v1162 = vpack.c.b16 %v966, %v962
    %v1163 = vpack.c.b16 %v967, %v963
    %v1164 = vpack.c.b16 %v968, %v964
    %v1165 = vpack.c.b16 %v973, %v969
    %v1166 = vpack.c.b16 %v974, %v970
    %v1167 = vpack.c.b16 %v975, %v971
    %v1168 = vpack.c.b16 %v976, %v972
    %v1169 = vpack.c.b16 %v981, %v977
    %v1170 = vpack.c.b16 %v982, %v978
    %v1171 = vpack.c.b16 %v983, %v979
    %v1172 = vpack.c.b16 %v984, %v980
    %v1173 = vpack.c.b16 %v989, %v985
    %v1174 = vpack.c.b16 %v990, %v986
    %v1175 = vpack.c.b16 %v991, %v987
    %v1176 = vpack.c.b16 %v992, %v988
    %v1177 = vpack.c.b16 %v997, %v993
    %v1178 = vpack.c.b16 %v998, %v994
    %v1179 = vpack.c.b16 %v999, %v995
    %v1180 = vpack.c.b16 %v1000, %v996
    %v1181 = vpack.c.b16 %v1005, %v1001
    %v1182 = vpack.c.b16 %v1006, %v1002
    %v1183 = vpack.c.b16 %v1007, %v1003
    %v1184 = vpack.c.b16 %v1008, %v1004
    %v1185 = vpack.c.b16 %v1013, %v1009
    %v1186 = vpack.c.b16 %v1014, %v1010
    %v1187 = vpack.c.b16 %v1015, %v1011
    %v1188 = vpack.c.b16 %v1016, %v1012
    %v1189 = vpack.c.b16 %v1021, %v1017
    %v1190 = vpack.c.b16 %v1022, %v1018
    %v1191 = vpack.c.b16 %v1023, %v1019
    %v1192 = vpack.c.b16 %v1024, %v1020
    %v1193 = vpack.c.b16 %v1029, %v1025
    %v1194 = vpack.c.b16 %v1030, %v1026
    %v1195 = vpack.c.b16 %v1031, %v1027
    %v1196 = vpack.c.b16 %v1032, %v1028
    %v1197 = vpack.c.b16 %v1037, %v1033
    %v1198 = vpack.c.b16 %v1038, %v1034
    %v1199 = vpack.c.b16 %v1039, %v1035
    %v1200 = vpack.c.b16 %v1040, %v1036
    %v1201 = vpack.c.b16 %v1045, %v1041
    %v1202 = vpack.c.b16 %v1046, %v1042
    %v1203 = vpack.c.b16 %v1047, %v1043
    %v1204 = vpack.c.b16 %v1048, %v1044
    %v1205 = vpack.c.b16 %v1053, %v1049
    %v1206 = vpack.c.b16 %v1054, %v1050
    %v1207 = vpack.c.b16 %v1055, %v1051
    %v1208 = vpack.c.b16 %v1056, %v1052
    %v1209 = vpack.c.b16 %v1061, %v1057
    %v1210 = vpack.c.b16 %v1062, %v1058
    %v1211 = vpack.c.b16 %v1063, %v1059
    %v1212 = vpack.c.b16 %v1064, %v1060
    %v1213 = vpack.c.b16 %v1069, %v1065
    %v1214 = vpack.c.b16 %v1070, %v1066
    %v1215 = vpack.c.b16 %v1071, %v1067
    %v1216 = vpack.c.b16 %v1072, %v1068
    %v1217 = vpack.c.b16 %v1077, %v1073
    %v1218 = vpack.c.b16 %v1078, %v1074
    %v1219 = vpack.c.b16 %v1079, %v1075
    %v1220 = vpack.c.b16 %v1080, %v1076
    %v1221 = vpack.c.b16 %v1085, %v1081
    %v1222 = vpack.c.b16 %v1086, %v1082
    %v1223 = vpack.c.b16 %v1087, %v1083
    %v1224 = vpack.c.b16 %v1088, %v1084
    %v1225 = vpack.c.b16 %v1093, %v1089
    %v1226 = vpack.c.b16 %v1094, %v1090
    %v1227 = vpack.c.b16 %v1095, %v1091
    %v1228 = vpack.c.b16 %v1096, %v1092
    %v1229 = vpack.c.b16 %v1101, %v1097
    %v1230 = vpack.c.b16 %v1102, %v1098
    %v1231 = vpack.c.b16 %v1103, %v1099
    %v1232 = vpack.c.b16 %v1104, %v1100
    %1361 = vmatprep.subr.bf16.mxu0 %v1134
    %1362 = vmatpush1.bf16.msra.mxu0 %v1133
    %1363 = vmatprep.subr.bf16.mxu0 %v1130
    %1364 = vmatpush1.bf16.msra.mxu0 %v1129
    %1365 = vmatprep.subr.bf16.mxu0 %v1126
    %1366 = vmatpush1.bf16.msra.mxu0 %v1125
    %1367 = vmatprep.subr.bf16.mxu0 %v1122
    %1368 = vmatpush1.bf16.msra.mxu0 %v1121
    %1369 = vmatprep.subr.bf16.mxu0 %v1118
    %1370 = vmatpush1.bf16.msra.mxu0 %v1117
    %1371 = vmatprep.subr.bf16.mxu0 %v1114
    %1372 = vmatpush1.bf16.msra.mxu0 %v1113
    %1373 = vmatprep.subr.bf16.mxu0 %v1110
    %1374 = vmatpush1.bf16.msra.mxu0 %v1109
    %1375 = vmatprep.subr.bf16.mxu0 %v1106
    %1376 = vmatpush1.bf16.msra.mxu0 %v1105
    %1377 = vmatprep.subr.bf16.mxu0 %v1166
    %1378 = vmatpush2.bf16.msra.mxu0 %v1165
    %1379 = vmatprep.subr.bf16.mxu0 %v1162
    %1380 = vmatpush2.bf16.msra.mxu0 %v1161
    %1381 = vmatprep.subr.bf16.mxu0 %v1158
    %1382 = vmatpush2.bf16.msra.mxu0 %v1157
    %1383 = vmatprep.subr.bf16.mxu0 %v1154
    %1384 = vmatpush2.bf16.msra.mxu0 %v1153
    %1385 = vmatprep.subr.bf16.mxu0 %v1150
    %1386 = vmatpush2.bf16.msra.mxu0 %v1149
    %1387 = vmatprep.subr.bf16.mxu0 %v1146
    %1388 = vmatpush2.bf16.msra.mxu0 %v1145
    %1389 = vmatprep.subr.bf16.mxu0 %v1142
    %1390 = vmatpush2.bf16.msra.mxu0 %v1141
    %1391 = vmatprep.subr.bf16.mxu0 %v1138
    %1392 = vmatpush2.bf16.msra.mxu0 %v1137
    %1393 = vmatprep.mubr.bf16.mxu0 %v590
    %1394 = vmatmul.mubr.bf16.gmra.mxu0 %v589
    %v1395 = vpop.f32.mrf.mxu0
    %v1396 = vadd.f32 0.0, %v1395
    %v1397 = vpop.f32.mrf.mxu0
    %v1398 = vadd.f32 0.0, %v1397
    %v1399 = vpop.f32.mrf.mxu0
    %v1400 = vpop.f32.mrf.mxu0
    %1401 = vdwg.mxu0
    %1402 = vmatprep.subr.bf16.mxu0 %v1198
    %1403 = vmatpush1.bf16.msra.mxu0 %v1197
    %1404 = vmatprep.subr.bf16.mxu0 %v1194
    %1405 = vmatpush1.bf16.msra.mxu0 %v1193
    %1406 = vmatprep.subr.bf16.mxu0 %v1190
    %1407 = vmatpush1.bf16.msra.mxu0 %v1189
    %1408 = vmatprep.subr.bf16.mxu0 %v1186
    %1409 = vmatpush1.bf16.msra.mxu0 %v1185
    %1410 = vmatprep.subr.bf16.mxu0 %v1182
    %1411 = vmatpush1.bf16.msra.mxu0 %v1181
    %1412 = vmatprep.subr.bf16.mxu0 %v1178
    %1413 = vmatpush1.bf16.msra.mxu0 %v1177
    %1414 = vmatprep.subr.bf16.mxu0 %v1174
    %1415 = vmatpush1.bf16.msra.mxu0 %v1173
    %1416 = vmatprep.subr.bf16.mxu0 %v1170
    %1417 = vmatpush1.bf16.msra.mxu0 %v1169
    %1418 = vmatprep.subr.bf16.mxu0 %v1230
    %1419 = vmatpush2.bf16.msra.mxu0 %v1229
    %1420 = vmatprep.subr.bf16.mxu0 %v1226
    %1421 = vmatpush2.bf16.msra.mxu0 %v1225
    %1422 = vmatprep.subr.bf16.mxu0 %v1222
    %1423 = vmatpush2.bf16.msra.mxu0 %v1221
    %1424 = vmatprep.subr.bf16.mxu0 %v1218
    %1425 = vmatpush2.bf16.msra.mxu0 %v1217
    %1426 = vmatprep.subr.bf16.mxu0 %v1214
    %1427 = vmatpush2.bf16.msra.mxu0 %v1213
    %1428 = vmatprep.subr.bf16.mxu0 %v1210
    %1429 = vmatpush2.bf16.msra.mxu0 %v1209
    %1430 = vmatprep.subr.bf16.mxu0 %v1206
    %1431 = vmatpush2.bf16.msra.mxu0 %v1205
    %1432 = vmatprep.subr.bf16.mxu0 %v1202
    %1433 = vmatpush2.bf16.msra.mxu0 %v1201
    %1434 = vmatprep.mubr.bf16.mxu0 %v592
    %1435 = vmatmul.mubr.bf16.gmra.mxu0 %v591
    %v1436 = vpop.f32.mrf.mxu0
    %v1437 = vadd.f32 %v1396, %v1436
    %v1438 = vpop.f32.mrf.mxu0
    %v1439 = vadd.f32 %v1398, %v1438
    %v1440 = vpop.f32.mrf.mxu0
    %v1441 = vpop.f32.mrf.mxu0
    %1442 = vdwg.mxu0
    %1443 = vmatprep.subr.bf16.mxu0 %v1136
    %1444 = vmatpush1.bf16.msra.mxu0 %v1135
    %1445 = vmatprep.subr.bf16.mxu0 %v1132
    %1446 = vmatpush1.bf16.msra.mxu0 %v1131
    %1447 = vmatprep.subr.bf16.mxu0 %v1128
    %1448 = vmatpush1.bf16.msra.mxu0 %v1127
    %1449 = vmatprep.subr.bf16.mxu0 %v1124
    %1450 = vmatpush1.bf16.msra.mxu0 %v1123
    %1451 = vmatprep.subr.bf16.mxu0 %v1120
    %1452 = vmatpush1.bf16.msra.mxu0 %v1119
    %1453 = vmatprep.subr.bf16.mxu0 %v1116
    %1454 = vmatpush1.bf16.msra.mxu0 %v1115
    %1455 = vmatprep.subr.bf16.mxu0 %v1112
    %1456 = vmatpush1.bf16.msra.mxu0 %v1111
    %1457 = vmatprep.subr.bf16.mxu0 %v1108
    %1458 = vmatpush1.bf16.msra.mxu0 %v1107
    %1459 = vmatprep.subr.bf16.mxu0 %v1168
    %1460 = vmatpush2.bf16.msra.mxu0 %v1167
    %1461 = vmatprep.subr.bf16.mxu0 %v1164
    %1462 = vmatpush2.bf16.msra.mxu0 %v1163
    %1463 = vmatprep.subr.bf16.mxu0 %v1160
    %1464 = vmatpush2.bf16.msra.mxu0 %v1159
    %1465 = vmatprep.subr.bf16.mxu0 %v1156
    %1466 = vmatpush2.bf16.msra.mxu0 %v1155
    %1467 = vmatprep.subr.bf16.mxu0 %v1152
    %1468 = vmatpush2.bf16.msra.mxu0 %v1151
    %1469 = vmatprep.subr.bf16.mxu0 %v1148
    %1470 = vmatpush2.bf16.msra.mxu0 %v1147
    %1471 = vmatprep.subr.bf16.mxu0 %v1144
    %1472 = vmatpush2.bf16.msra.mxu0 %v1143
    %1473 = vmatprep.subr.bf16.mxu0 %v1140
    %1474 = vmatpush2.bf16.msra.mxu0 %v1139
    %1475 = vmatprep.mubr.bf16.mxu0 %v590
    %1476 = vmatmul.mubr.bf16.gmra.mxu0 %v589
    %v1477 = vpop.f32.mrf.mxu0
    %v1478 = vadd.f32 0.0, %v1477
    %v1479 = vpop.f32.mrf.mxu0
    %v1480 = vadd.f32 0.0, %v1479
    %v1481 = vpop.f32.mrf.mxu0
    %v1482 = vpop.f32.mrf.mxu0
    %1483 = vdwg.mxu0
    %1484 = vmatprep.subr.bf16.mxu0 %v1200
    %1485 = vmatpush1.bf16.msra.mxu0 %v1199
    %1486 = vmatprep.subr.bf16.mxu0 %v1196
    %1487 = vmatpush1.bf16.msra.mxu0 %v1195
    %1488 = vmatprep.subr.bf16.mxu0 %v1192
    %1489 = vmatpush1.bf16.msra.mxu0 %v1191
    %1490 = vmatprep.subr.bf16.mxu0 %v1188
    %1491 = vmatpush1.bf16.msra.mxu0 %v1187
    %1492 = vmatprep.subr.bf16.mxu0 %v1184
    %1493 = vmatpush1.bf16.msra.mxu0 %v1183
    %1494 = vmatprep.subr.bf16.mxu0 %v1180
    %1495 = vmatpush1.bf16.msra.mxu0 %v1179
    %1496 = vmatprep.subr.bf16.mxu0 %v1176
    %1497 = vmatpush1.bf16.msra.mxu0 %v1175
    %1498 = vmatprep.subr.bf16.mxu0 %v1172
    %1499 = vmatpush1.bf16.msra.mxu0 %v1171
    %1500 = vmatprep.subr.bf16.mxu0 %v1232
    %1501 = vmatpush2.bf16.msra.mxu0 %v1231
    %1502 = vmatprep.subr.bf16.mxu0 %v1228
    %1503 = vmatpush2.bf16.msra.mxu0 %v1227
    %1504 = vmatprep.subr.bf16.mxu0 %v1224
    %1505 = vmatpush2.bf16.msra.mxu0 %v1223
    %1506 = vmatprep.subr.bf16.mxu0 %v1220
    %1507 = vmatpush2.bf16.msra.mxu0 %v1219
    %1508 = vmatprep.subr.bf16.mxu0 %v1216
    %1509 = vmatpush2.bf16.msra.mxu0 %v1215
    %1510 = vmatprep.subr.bf16.mxu0 %v1212
    %1511 = vmatpush2.bf16.msra.mxu0 %v1211
    %1512 = vmatprep.subr.bf16.mxu0 %v1208
    %1513 = vmatpush2.bf16.msra.mxu0 %v1207
    %1514 = vmatprep.subr.bf16.mxu0 %v1204
    %1515 = vmatpush2.bf16.msra.mxu0 %v1203
    %1516 = vmatprep.mubr.bf16.mxu0 %v592
    %1517 = vmatmul.mubr.bf16.gmra.mxu0 %v591
    %v1518 = vpop.f32.mrf.mxu0
    %v1519 = vadd.f32 %v1478, %v1518
    %v1520 = vpop.f32.mrf.mxu0
    %v1521 = vadd.f32 %v1480, %v1520
    %v1522 = vpop.f32.mrf.mxu0
    %v1523 = vpop.f32.mrf.mxu0
    %1524 = vdwg.mxu0
    %v1525 = vmax.f32 %v1437, 0.0
    %v1526 = vmax.f32 %v1439, 0.0
    %v1527 = vmax.f32 %v1519, 0.0
    %v1528 = vmax.f32 %v1521, 0.0
    %v1529 = vpack.c.bf16 %v1525, %v1525
    %v1530 = vpack.c.bf16 %v1526, %v1526
    %v1531 = vpack.c.bf16 %v1527, %v1527
    %v1532 = vpack.c.bf16 %v1528, %v1528
    %v1533 = vld [vmem:[#allocation7] sm:$0xff]
    %v1534 = vld [vmem:[#allocation7 + $0x8] sm:$0xff]
    %v1535 = vld [vmem:[#allocation7 + $0x10] sm:$0xff]
    %v1536 = vld [vmem:[#allocation7 + $0x18] sm:$0xff]
    %v1537 = vld [vmem:[#allocation7 + $0x20] sm:$0xff]
    %v1538 = vld [vmem:[#allocation7 + $0x28] sm:$0xff]
    %v1539 = vld [vmem:[#allocation7 + $0x30] sm:$0xff]
    %v1540 = vld [vmem:[#allocation7 + $0x38] sm:$0xff]
    %v1541 = vld [vmem:[#allocation7 + $0x40] sm:$0xff]
    %v1542 = vld [vmem:[#allocation7 + $0x48] sm:$0xff]
    %v1543 = vld [vmem:[#allocation7 + $0x50] sm:$0xff]
    %v1544 = vld [vmem:[#allocation7 + $0x58] sm:$0xff]
    %v1545 = vld [vmem:[#allocation7 + $0x60] sm:$0xff]
    %v1546 = vld [vmem:[#allocation7 + $0x68] sm:$0xff]
    %v1547 = vld [vmem:[#allocation7 + $0x70] sm:$0xff]
    %v1548 = vld [vmem:[#allocation7 + $0x78] sm:$0xff]
    %v1549 = vld [vmem:[#allocation7 + $0x80] sm:$0xff]
    %v1550 = vld [vmem:[#allocation7 + $0x88] sm:$0xff]
    %v1551 = vld [vmem:[#allocation7 + $0x90] sm:$0xff]
    %v1552 = vld [vmem:[#allocation7 + $0x98] sm:$0xff]
    %v1553 = vld [vmem:[#allocation7 + $0xa0] sm:$0xff]
    %v1554 = vld [vmem:[#allocation7 + $0xa8] sm:$0xff]
    %v1555 = vld [vmem:[#allocation7 + $0xb0] sm:$0xff]
    %v1556 = vld [vmem:[#allocation7 + $0xb8] sm:$0xff]
    %v1557 = vld [vmem:[#allocation7 + $0xc0] sm:$0xff]
    %v1558 = vld [vmem:[#allocation7 + $0xc8] sm:$0xff]
    %v1559 = vld [vmem:[#allocation7 + $0xd0] sm:$0xff]
    %v1560 = vld [vmem:[#allocation7 + $0xd8] sm:$0xff]
    %v1561 = vld [vmem:[#allocation7 + $0xe0] sm:$0xff]
    %v1562 = vld [vmem:[#allocation7 + $0xe8] sm:$0xff]
    %v1563 = vld [vmem:[#allocation7 + $0xf0] sm:$0xff]
    %v1564 = vld [vmem:[#allocation7 + $0xf8] sm:$0xff]
    %v1565 = vld [vmem:[#allocation7 + $0x100] sm:$0xff]
    %v1566 = vld [vmem:[#allocation7 + $0x108] sm:$0xff]
    %v1567 = vld [vmem:[#allocation7 + $0x110] sm:$0xff]
    %v1568 = vld [vmem:[#allocation7 + $0x118] sm:$0xff]
    %v1569 = vld [vmem:[#allocation7 + $0x120] sm:$0xff]
    %v1570 = vld [vmem:[#allocation7 + $0x128] sm:$0xff]
    %v1571 = vld [vmem:[#allocation7 + $0x130] sm:$0xff]
    %v1572 = vld [vmem:[#allocation7 + $0x138] sm:$0xff]
    %v1573 = vld [vmem:[#allocation7 + $0x140] sm:$0xff]
    %v1574 = vld [vmem:[#allocation7 + $0x148] sm:$0xff]
    %v1575 = vld [vmem:[#allocation7 + $0x150] sm:$0xff]
    %v1576 = vld [vmem:[#allocation7 + $0x158] sm:$0xff]
    %v1577 = vld [vmem:[#allocation7 + $0x160] sm:$0xff]
    %v1578 = vld [vmem:[#allocation7 + $0x168] sm:$0xff]
    %v1579 = vld [vmem:[#allocation7 + $0x170] sm:$0xff]
    %v1580 = vld [vmem:[#allocation7 + $0x178] sm:$0xff]
    %v1581 = vld [vmem:[#allocation7 + $0x180] sm:$0xff]
    %v1582 = vld [vmem:[#allocation7 + $0x188] sm:$0xff]
    %v1583 = vld [vmem:[#allocation7 + $0x190] sm:$0xff]
    %v1584 = vld [vmem:[#allocation7 + $0x198] sm:$0xff]
    %v1585 = vld [vmem:[#allocation7 + $0x1a0] sm:$0xff]
    %v1586 = vld [vmem:[#allocation7 + $0x1a8] sm:$0xff]
    %v1587 = vld [vmem:[#allocation7 + $0x1b0] sm:$0xff]
    %v1588 = vld [vmem:[#allocation7 + $0x1b8] sm:$0xff]
    %v1589 = vld [vmem:[#allocation7 + $0x1c0] sm:$0xff]
    %v1590 = vld [vmem:[#allocation7 + $0x1c8] sm:$0xff]
    %v1591 = vld [vmem:[#allocation7 + $0x1d0] sm:$0xff]
    %v1592 = vld [vmem:[#allocation7 + $0x1d8] sm:$0xff]
    %v1593 = vld [vmem:[#allocation7 + $0x1e0] sm:$0xff]
    %v1594 = vld [vmem:[#allocation7 + $0x1e8] sm:$0xff]
    %v1595 = vld [vmem:[#allocation7 + $0x1f0] sm:$0xff]
    %v1596 = vld [vmem:[#allocation7 + $0x1f8] sm:$0xff]
    %v1661 = vunpack.c.l.b16 %v1533
    %v1662 = vunpack.c.h.b16 %v1533
    %v1663 = vunpack.c.l.b16 %v1534
    %v1664 = vunpack.c.h.b16 %v1534
    %v1665 = vunpack.c.l.b16 %v1535
    %v1666 = vunpack.c.h.b16 %v1535
    %v1667 = vunpack.c.l.b16 %v1536
    %v1668 = vunpack.c.h.b16 %v1536
    %v1669 = vunpack.c.l.b16 %v1537
    %v1670 = vunpack.c.h.b16 %v1537
    %v1671 = vunpack.c.l.b16 %v1538
    %v1672 = vunpack.c.h.b16 %v1538
    %v1673 = vunpack.c.l.b16 %v1539
    %v1674 = vunpack.c.h.b16 %v1539
    %v1675 = vunpack.c.l.b16 %v1540
    %v1676 = vunpack.c.h.b16 %v1540
    %v1677 = vunpack.c.l.b16 %v1541
    %v1678 = vunpack.c.h.b16 %v1541
    %v1679 = vunpack.c.l.b16 %v1542
    %v1680 = vunpack.c.h.b16 %v1542
    %v1681 = vunpack.c.l.b16 %v1543
    %v1682 = vunpack.c.h.b16 %v1543
    %v1683 = vunpack.c.l.b16 %v1544
    %v1684 = vunpack.c.h.b16 %v1544
    %v1685 = vunpack.c.l.b16 %v1545
    %v1686 = vunpack.c.h.b16 %v1545
    %v1687 = vunpack.c.l.b16 %v1546
    %v1688 = vunpack.c.h.b16 %v1546
    %v1689 = vunpack.c.l.b16 %v1547
    %v1690 = vunpack.c.h.b16 %v1547
    %v1691 = vunpack.c.l.b16 %v1548
    %v1692 = vunpack.c.h.b16 %v1548
    %v1693 = vunpack.c.l.b16 %v1549
    %v1694 = vunpack.c.h.b16 %v1549
    %v1695 = vunpack.c.l.b16 %v1550
    %v1696 = vunpack.c.h.b16 %v1550
    %v1697 = vunpack.c.l.b16 %v1551
    %v1698 = vunpack.c.h.b16 %v1551
    %v1699 = vunpack.c.l.b16 %v1552
    %v1700 = vunpack.c.h.b16 %v1552
    %v1701 = vunpack.c.l.b16 %v1553
    %v1702 = vunpack.c.h.b16 %v1553
    %v1703 = vunpack.c.l.b16 %v1554
    %v1704 = vunpack.c.h.b16 %v1554
    %v1705 = vunpack.c.l.b16 %v1555
    %v1706 = vunpack.c.h.b16 %v1555
    %v1707 = vunpack.c.l.b16 %v1556
    %v1708 = vunpack.c.h.b16 %v1556
    %v1709 = vunpack.c.l.b16 %v1557
    %v1710 = vunpack.c.h.b16 %v1557
    %v1711 = vunpack.c.l.b16 %v1558
    %v1712 = vunpack.c.h.b16 %v1558
    %v1713 = vunpack.c.l.b16 %v1559
    %v1714 = vunpack.c.h.b16 %v1559
    %v1715 = vunpack.c.l.b16 %v1560
    %v1716 = vunpack.c.h.b16 %v1560
    %v1717 = vunpack.c.l.b16 %v1561
    %v1718 = vunpack.c.h.b16 %v1561
    %v1719 = vunpack.c.l.b16 %v1562
    %v1720 = vunpack.c.h.b16 %v1562
    %v1721 = vunpack.c.l.b16 %v1563
    %v1722 = vunpack.c.h.b16 %v1563
    %v1723 = vunpack.c.l.b16 %v1564
    %v1724 = vunpack.c.h.b16 %v1564
    %v1725 = vunpack.c.l.b16 %v1565
    %v1726 = vunpack.c.h.b16 %v1565
    %v1727 = vunpack.c.l.b16 %v1566
    %v1728 = vunpack.c.h.b16 %v1566
    %v1729 = vunpack.c.l.b16 %v1567
    %v1730 = vunpack.c.h.b16 %v1567
    %v1731 = vunpack.c.l.b16 %v1568
    %v1732 = vunpack.c.h.b16 %v1568
    %v1733 = vunpack.c.l.b16 %v1569
    %v1734 = vunpack.c.h.b16 %v1569
    %v1735 = vunpack.c.l.b16 %v1570
    %v1736 = vunpack.c.h.b16 %v1570
    %v1737 = vunpack.c.l.b16 %v1571
    %v1738 = vunpack.c.h.b16 %v1571
    %v1739 = vunpack.c.l.b16 %v1572
    %v1740 = vunpack.c.h.b16 %v1572
    %v1741 = vunpack.c.l.b16 %v1573
    %v1742 = vunpack.c.h.b16 %v1573
    %v1743 = vunpack.c.l.b16 %v1574
    %v1744 = vunpack.c.h.b16 %v1574
    %v1745 = vunpack.c.l.b16 %v1575
    %v1746 = vunpack.c.h.b16 %v1575
    %v1747 = vunpack.c.l.b16 %v1576
    %v1748 = vunpack.c.h.b16 %v1576
    %v1749 = vunpack.c.l.b16 %v1577
    %v1750 = vunpack.c.h.b16 %v1577
    %v1751 = vunpack.c.l.b16 %v1578
    %v1752 = vunpack.c.h.b16 %v1578
    %v1753 = vunpack.c.l.b16 %v1579
    %v1754 = vunpack.c.h.b16 %v1579
    %v1755 = vunpack.c.l.b16 %v1580
    %v1756 = vunpack.c.h.b16 %v1580
    %v1757 = vunpack.c.l.b16 %v1581
    %v1758 = vunpack.c.h.b16 %v1581
    %v1759 = vunpack.c.l.b16 %v1582
    %v1760 = vunpack.c.h.b16 %v1582
    %v1761 = vunpack.c.l.b16 %v1583
    %v1762 = vunpack.c.h.b16 %v1583
    %v1763 = vunpack.c.l.b16 %v1584
    %v1764 = vunpack.c.h.b16 %v1584
    %v1765 = vunpack.c.l.b16 %v1585
    %v1766 = vunpack.c.h.b16 %v1585
    %v1767 = vunpack.c.l.b16 %v1586
    %v1768 = vunpack.c.h.b16 %v1586
    %v1769 = vunpack.c.l.b16 %v1587
    %v1770 = vunpack.c.h.b16 %v1587
    %v1771 = vunpack.c.l.b16 %v1588
    %v1772 = vunpack.c.h.b16 %v1588
    %v1773 = vunpack.c.l.b16 %v1589
    %v1774 = vunpack.c.h.b16 %v1589
    %v1775 = vunpack.c.l.b16 %v1590
    %v1776 = vunpack.c.h.b16 %v1590
    %v1777 = vunpack.c.l.b16 %v1591
    %v1778 = vunpack.c.h.b16 %v1591
    %v1779 = vunpack.c.l.b16 %v1592
    %v1780 = vunpack.c.h.b16 %v1592
    %v1781 = vunpack.c.l.b16 %v1593
    %v1782 = vunpack.c.h.b16 %v1593
    %v1783 = vunpack.c.l.b16 %v1594
    %v1784 = vunpack.c.h.b16 %v1594
    %v1785 = vunpack.c.l.b16 %v1595
    %v1786 = vunpack.c.h.b16 %v1595
    %v1787 = vunpack.c.l.b16 %v1596
    %v1788 = vunpack.c.h.b16 %v1596
    %v1789 = vpack.c.b16 %v1663, %v1661
    %v1790 = vpack.c.b16 %v1664, %v1662
    %v1791 = vpack.c.b16 %v1667, %v1665
    %v1792 = vpack.c.b16 %v1668, %v1666
    %v1793 = vpack.c.b16 %v1671, %v1669
    %v1794 = vpack.c.b16 %v1672, %v1670
    %v1795 = vpack.c.b16 %v1675, %v1673
    %v1796 = vpack.c.b16 %v1676, %v1674
    %v1797 = vpack.c.b16 %v1679, %v1677
    %v1798 = vpack.c.b16 %v1680, %v1678
    %v1799 = vpack.c.b16 %v1683, %v1681
    %v1800 = vpack.c.b16 %v1684, %v1682
    %v1801 = vpack.c.b16 %v1687, %v1685
    %v1802 = vpack.c.b16 %v1688, %v1686
    %v1803 = vpack.c.b16 %v1691, %v1689
    %v1804 = vpack.c.b16 %v1692, %v1690
    %v1805 = vpack.c.b16 %v1695, %v1693
    %v1806 = vpack.c.b16 %v1696, %v1694
    %v1807 = vpack.c.b16 %v1699, %v1697
    %v1808 = vpack.c.b16 %v1700, %v1698
    %v1809 = vpack.c.b16 %v1703, %v1701
    %v1810 = vpack.c.b16 %v1704, %v1702
    %v1811 = vpack.c.b16 %v1707, %v1705
    %v1812 = vpack.c.b16 %v1708, %v1706
    %v1813 = vpack.c.b16 %v1711, %v1709
    %v1814 = vpack.c.b16 %v1712, %v1710
    %v1815 = vpack.c.b16 %v1715, %v1713
    %v1816 = vpack.c.b16 %v1716, %v1714
    %v1817 = vpack.c.b16 %v1719, %v1717
    %v1818 = vpack.c.b16 %v1720, %v1718
    %v1819 = vpack.c.b16 %v1723, %v1721
    %v1820 = vpack.c.b16 %v1724, %v1722
    %v1821 = vpack.c.b16 %v1727, %v1725
    %v1822 = vpack.c.b16 %v1728, %v1726
    %v1823 = vpack.c.b16 %v1731, %v1729
    %v1824 = vpack.c.b16 %v1732, %v1730
    %v1825 = vpack.c.b16 %v1735, %v1733
    %v1826 = vpack.c.b16 %v1736, %v1734
    %v1827 = vpack.c.b16 %v1739, %v1737
    %v1828 = vpack.c.b16 %v1740, %v1738
    %v1829 = vpack.c.b16 %v1743, %v1741
    %v1830 = vpack.c.b16 %v1744, %v1742
    %v1831 = vpack.c.b16 %v1747, %v1745
    %v1832 = vpack.c.b16 %v1748, %v1746
    %v1833 = vpack.c.b16 %v1751, %v1749
    %v1834 = vpack.c.b16 %v1752, %v1750
    %v1835 = vpack.c.b16 %v1755, %v1753
    %v1836 = vpack.c.b16 %v1756, %v1754
    %v1837 = vpack.c.b16 %v1759, %v1757
    %v1838 = vpack.c.b16 %v1760, %v1758
    %v1839 = vpack.c.b16 %v1763, %v1761
    %v1840 = vpack.c.b16 %v1764, %v1762
    %v1841 = vpack.c.b16 %v1767, %v1765
    %v1842 = vpack.c.b16 %v1768, %v1766
    %v1843 = vpack.c.b16 %v1771, %v1769
    %v1844 = vpack.c.b16 %v1772, %v1770
    %v1845 = vpack.c.b16 %v1775, %v1773
    %v1846 = vpack.c.b16 %v1776, %v1774
    %v1847 = vpack.c.b16 %v1779, %v1777
    %v1848 = vpack.c.b16 %v1780, %v1778
    %v1849 = vpack.c.b16 %v1783, %v1781
    %v1850 = vpack.c.b16 %v1784, %v1782
    %v1851 = vpack.c.b16 %v1787, %v1785
    %v1852 = vpack.c.b16 %v1788, %v1786
    %1917 = vmatprep.subr.bf16.mxu0 %v1804
    %1918 = vmatpush1.bf16.msra.mxu0 %v1803
    %1919 = vmatprep.subr.bf16.mxu0 %v1802
    %1920 = vmatpush1.bf16.msra.mxu0 %v1801
    %1921 = vmatprep.subr.bf16.mxu0 %v1800
    %1922 = vmatpush1.bf16.msra.mxu0 %v1799
    %1923 = vmatprep.subr.bf16.mxu0 %v1798
    %1924 = vmatpush1.bf16.msra.mxu0 %v1797
    %1925 = vmatprep.subr.bf16.mxu0 %v1796
    %1926 = vmatpush1.bf16.msra.mxu0 %v1795
    %1927 = vmatprep.subr.bf16.mxu0 %v1794
    %1928 = vmatpush1.bf16.msra.mxu0 %v1793
    %1929 = vmatprep.subr.bf16.mxu0 %v1792
    %1930 = vmatpush1.bf16.msra.mxu0 %v1791
    %1931 = vmatprep.subr.bf16.mxu0 %v1790
    %1932 = vmatpush1.bf16.msra.mxu0 %v1789
    %1933 = vmatprep.subr.bf16.mxu0 %v1820
    %1934 = vmatpush2.bf16.msra.mxu0 %v1819
    %1935 = vmatprep.subr.bf16.mxu0 %v1818
    %1936 = vmatpush2.bf16.msra.mxu0 %v1817
    %1937 = vmatprep.subr.bf16.mxu0 %v1816
    %1938 = vmatpush2.bf16.msra.mxu0 %v1815
    %1939 = vmatprep.subr.bf16.mxu0 %v1814
    %1940 = vmatpush2.bf16.msra.mxu0 %v1813
    %1941 = vmatprep.subr.bf16.mxu0 %v1812
    %1942 = vmatpush2.bf16.msra.mxu0 %v1811
    %1943 = vmatprep.subr.bf16.mxu0 %v1810
    %1944 = vmatpush2.bf16.msra.mxu0 %v1809
    %1945 = vmatprep.subr.bf16.mxu0 %v1808
    %1946 = vmatpush2.bf16.msra.mxu0 %v1807
    %1947 = vmatprep.subr.bf16.mxu0 %v1806
    %1948 = vmatpush2.bf16.msra.mxu0 %v1805
    %1949 = vmatprep.mubr.bf16.mxu0 %v1530
    %1950 = vmatmul.mubr.bf16.gmra.mxu0 %v1529
    %v1951 = vpop.f32.mrf.mxu0
    %v1952 = vadd.f32 0.0, %v1951
    %v1953 = vpop.f32.mrf.mxu0
    %v1954 = vadd.f32 0.0, %v1953
    %v1955 = vpop.f32.mrf.mxu0
    %v1956 = vpop.f32.mrf.mxu0
    %1957 = vdwg.mxu0
    %1958 = vmatprep.subr.bf16.mxu0 %v1836
    %1959 = vmatpush1.bf16.msra.mxu0 %v1835
    %1960 = vmatprep.subr.bf16.mxu0 %v1834
    %1961 = vmatpush1.bf16.msra.mxu0 %v1833
    %1962 = vmatprep.subr.bf16.mxu0 %v1832
    %1963 = vmatpush1.bf16.msra.mxu0 %v1831
    %1964 = vmatprep.subr.bf16.mxu0 %v1830
    %1965 = vmatpush1.bf16.msra.mxu0 %v1829
    %1966 = vmatprep.subr.bf16.mxu0 %v1828
    %1967 = vmatpush1.bf16.msra.mxu0 %v1827
    %1968 = vmatprep.subr.bf16.mxu0 %v1826
    %1969 = vmatpush1.bf16.msra.mxu0 %v1825
    %1970 = vmatprep.subr.bf16.mxu0 %v1824
    %1971 = vmatpush1.bf16.msra.mxu0 %v1823
    %1972 = vmatprep.subr.bf16.mxu0 %v1822
    %1973 = vmatpush1.bf16.msra.mxu0 %v1821
    %1974 = vmatprep.subr.bf16.mxu0 %v1852
    %1975 = vmatpush2.bf16.msra.mxu0 %v1851
    %1976 = vmatprep.subr.bf16.mxu0 %v1850
    %1977 = vmatpush2.bf16.msra.mxu0 %v1849
    %1978 = vmatprep.subr.bf16.mxu0 %v1848
    %1979 = vmatpush2.bf16.msra.mxu0 %v1847
    %1980 = vmatprep.subr.bf16.mxu0 %v1846
    %1981 = vmatpush2.bf16.msra.mxu0 %v1845
    %1982 = vmatprep.subr.bf16.mxu0 %v1844
    %1983 = vmatpush2.bf16.msra.mxu0 %v1843
    %1984 = vmatprep.subr.bf16.mxu0 %v1842
    %1985 = vmatpush2.bf16.msra.mxu0 %v1841
    %1986 = vmatprep.subr.bf16.mxu0 %v1840
    %1987 = vmatpush2.bf16.msra.mxu0 %v1839
    %1988 = vmatprep.subr.bf16.mxu0 %v1838
    %1989 = vmatpush2.bf16.msra.mxu0 %v1837
    %1990 = vmatprep.mubr.bf16.mxu0 %v1532
    %1991 = vmatmul.mubr.bf16.gmra.mxu0 %v1531
    %v1992 = vpop.f32.mrf.mxu0
    %v1993 = vadd.f32 %v1952, %v1992
    %v1994 = vpop.f32.mrf.mxu0
    %v1995 = vadd.f32 %v1954, %v1994
    %v1996 = vpop.f32.mrf.mxu0
    %v1997 = vpop.f32.mrf.mxu0
    %1998 = vdwg.mxu0
    %v1999 = vmax.f32 %v1993, 0.0
    %v2000 = vmax.f32 %v1995, 0.0
    %v2001 = vpack.c.bf16 %v1999, %v1999
    %v2002 = vpack.c.bf16 %v2000, %v2000
    %v2003 = vld [vmem:[#allocation9] sm:$0xf]
    %v2004 = vld [vmem:[#allocation9 + $0x4] sm:$0xf]
    %v2005 = vld [vmem:[#allocation9 + $0x8] sm:$0xf]
    %v2006 = vld [vmem:[#allocation9 + $0xc] sm:$0xf]
    %v2007 = vld [vmem:[#allocation9 + $0x10] sm:$0xf]
    %v2008 = vld [vmem:[#allocation9 + $0x14] sm:$0xf]
    %v2009 = vld [vmem:[#allocation9 + $0x18] sm:$0xf]
    %v2010 = vld [vmem:[#allocation9 + $0x1c] sm:$0xf]
    %v2011 = vld [vmem:[#allocation9 + $0x20] sm:$0xf]
    %v2012 = vld [vmem:[#allocation9 + $0x24] sm:$0xf]
    %v2013 = vld [vmem:[#allocation9 + $0x28] sm:$0xf]
    %v2014 = vld [vmem:[#allocation9 + $0x2c] sm:$0xf]
    %v2015 = vld [vmem:[#allocation9 + $0x30] sm:$0xf]
    %v2016 = vld [vmem:[#allocation9 + $0x34] sm:$0xf]
    %v2017 = vld [vmem:[#allocation9 + $0x38] sm:$0xf]
    %v2018 = vld [vmem:[#allocation9 + $0x3c] sm:$0xf]
    %v2019 = vld [vmem:[#allocation9 + $0x40] sm:$0xf]
    %v2020 = vld [vmem:[#allocation9 + $0x44] sm:$0xf]
    %v2021 = vld [vmem:[#allocation9 + $0x48] sm:$0xf]
    %v2022 = vld [vmem:[#allocation9 + $0x4c] sm:$0xf]
    %v2023 = vld [vmem:[#allocation9 + $0x50] sm:$0xf]
    %v2024 = vld [vmem:[#allocation9 + $0x54] sm:$0xf]
    %v2025 = vld [vmem:[#allocation9 + $0x58] sm:$0xf]
    %v2026 = vld [vmem:[#allocation9 + $0x5c] sm:$0xf]
    %v2027 = vld [vmem:[#allocation9 + $0x60] sm:$0xf]
    %v2028 = vld [vmem:[#allocation9 + $0x64] sm:$0xf]
    %v2029 = vld [vmem:[#allocation9 + $0x68] sm:$0xf]
    %v2030 = vld [vmem:[#allocation9 + $0x6c] sm:$0xf]
    %v2031 = vld [vmem:[#allocation9 + $0x70] sm:$0xf]
    %v2032 = vld [vmem:[#allocation9 + $0x74] sm:$0xf]
    %v2033 = vld [vmem:[#allocation9 + $0x78] sm:$0xf]
    %v2034 = vld [vmem:[#allocation9 + $0x7c] sm:$0xf]
    %v2067 = vunpack.c.l.b16 %v2003
    %v2068 = vunpack.c.l.b16 %v2004
    %v2069 = vunpack.c.l.b16 %v2005
    %v2070 = vunpack.c.l.b16 %v2006
    %v2071 = vunpack.c.l.b16 %v2007
    %v2072 = vunpack.c.l.b16 %v2008
    %v2073 = vunpack.c.l.b16 %v2009
    %v2074 = vunpack.c.l.b16 %v2010
    %v2075 = vunpack.c.l.b16 %v2011
    %v2076 = vunpack.c.l.b16 %v2012
    %v2077 = vunpack.c.l.b16 %v2013
    %v2078 = vunpack.c.l.b16 %v2014
    %v2079 = vunpack.c.l.b16 %v2015
    %v2080 = vunpack.c.l.b16 %v2016
    %v2081 = vunpack.c.l.b16 %v2017
    %v2082 = vunpack.c.l.b16 %v2018
    %v2083 = vunpack.c.l.b16 %v2019
    %v2084 = vunpack.c.l.b16 %v2020
    %v2085 = vunpack.c.l.b16 %v2021
    %v2086 = vunpack.c.l.b16 %v2022
    %v2087 = vunpack.c.l.b16 %v2023
    %v2088 = vunpack.c.l.b16 %v2024
    %v2089 = vunpack.c.l.b16 %v2025
    %v2090 = vunpack.c.l.b16 %v2026
    %v2091 = vunpack.c.l.b16 %v2027
    %v2092 = vunpack.c.l.b16 %v2028
    %v2093 = vunpack.c.l.b16 %v2029
    %v2094 = vunpack.c.l.b16 %v2030
    %v2095 = vunpack.c.l.b16 %v2031
    %v2096 = vunpack.c.l.b16 %v2032
    %v2097 = vunpack.c.l.b16 %v2033
    %v2098 = vunpack.c.l.b16 %v2034
    %v2099 = vpack.c.b16 %v2068, %v2067
    %v2100 = vpack.c.b16 %v2070, %v2069
    %v2101 = vpack.c.b16 %v2072, %v2071
    %v2102 = vpack.c.b16 %v2074, %v2073
    %v2103 = vpack.c.b16 %v2076, %v2075
    %v2104 = vpack.c.b16 %v2078, %v2077
    %v2105 = vpack.c.b16 %v2080, %v2079
    %v2106 = vpack.c.b16 %v2082, %v2081
    %v2107 = vpack.c.b16 %v2084, %v2083
    %v2108 = vpack.c.b16 %v2086, %v2085
    %v2109 = vpack.c.b16 %v2088, %v2087
    %v2110 = vpack.c.b16 %v2090, %v2089
    %v2111 = vpack.c.b16 %v2092, %v2091
    %v2112 = vpack.c.b16 %v2094, %v2093
    %v2113 = vpack.c.b16 %v2096, %v2095
    %v2114 = vpack.c.b16 %v2098, %v2097
    %2131 = vmatprep.subr.bf16.mxu0 0
    %2132 = vmatpush1.bf16.msra.mxu0 %v2106
    %2133 = vmatprep.subr.bf16.mxu0 0
    %2134 = vmatpush1.bf16.msra.mxu0 %v2105
    %2135 = vmatprep.subr.bf16.mxu0 0
    %2136 = vmatpush1.bf16.msra.mxu0 %v2104
    %2137 = vmatprep.subr.bf16.mxu0 0
    %2138 = vmatpush1.bf16.msra.mxu0 %v2103
    %2139 = vmatprep.subr.bf16.mxu0 0
    %2140 = vmatpush1.bf16.msra.mxu0 %v2102
    %2141 = vmatprep.subr.bf16.mxu0 0
    %2142 = vmatpush1.bf16.msra.mxu0 %v2101
    %2143 = vmatprep.subr.bf16.mxu0 0
    %2144 = vmatpush1.bf16.msra.mxu0 %v2100
    %2145 = vmatprep.subr.bf16.mxu0 0
    %2146 = vmatpush1.bf16.msra.mxu0 %v2099
    %2147 = vmatprep.subr.bf16.mxu0 0
    %2148 = vmatpush2.bf16.msra.mxu0 %v2114
    %2149 = vmatprep.subr.bf16.mxu0 0
    %2150 = vmatpush2.bf16.msra.mxu0 %v2113
    %2151 = vmatprep.subr.bf16.mxu0 0
    %2152 = vmatpush2.bf16.msra.mxu0 %v2112
    %2153 = vmatprep.subr.bf16.mxu0 0
    %2154 = vmatpush2.bf16.msra.mxu0 %v2111
    %2155 = vmatprep.subr.bf16.mxu0 0
    %2156 = vmatpush2.bf16.msra.mxu0 %v2110
    %2157 = vmatprep.subr.bf16.mxu0 0
    %2158 = vmatpush2.bf16.msra.mxu0 %v2109
    %2159 = vmatprep.subr.bf16.mxu0 0
    %2160 = vmatpush2.bf16.msra.mxu0 %v2108
    %2161 = vmatprep.subr.bf16.mxu0 0
    %2162 = vmatpush2.bf16.msra.mxu0 %v2107
    %2163 = vmatprep.mubr.bf16.mxu0 %v2002
    %2164 = vmatmul.mubr.bf16.gmra.mxu0 %v2001
    %v2165 = vpop.f32.mrf.mxu0
    %v2166 = vadd.f32 0.0, %v2165
    %v2167 = vpop.f32.mrf.mxu0
    %v2168 = vpop.f32.mrf.mxu0
    %v2169 = vpop.f32.mrf.mxu0
    %2170 = vdwg.mxu0
    %v2171 = vmax.f32 %v2166, 0.0
    %v2172 = vpack.c.bf16 %v2171, %v2171
    %v2173 = vld [vmem:[%s6] sm:$0xf]
    %v2174 = vld [vmem:[%s6 + $0x4] sm:$0xf]
    %v2175 = vld [vmem:[%s6 + $0x8] sm:$0xf]
    %v2176 = vld [vmem:[%s6 + $0xc] sm:$0xf]
    %v2177 = vld [vmem:[%s6 + $0x10] sm:$0xf]
    %v2178 = vld [vmem:[%s6 + $0x14] sm:$0xf]
    %v2179 = vld [vmem:[%s6 + $0x18] sm:$0xf]
    %v2180 = vld [vmem:[%s6 + $0x1c] sm:$0xf]
    %v2181 = vld [vmem:[%s6 + $0x20] sm:$0xf]
    %v2182 = vld [vmem:[%s6 + $0x24] sm:$0xf]
    %v2183 = vld [vmem:[%s6 + $0x28] sm:$0xf]
    %v2184 = vld [vmem:[%s6 + $0x2c] sm:$0xf]
    %v2185 = vld [vmem:[%s6 + $0x30] sm:$0xf]
    %v2186 = vld [vmem:[%s6 + $0x34] sm:$0xf]
    %v2187 = vld [vmem:[%s6 + $0x38] sm:$0xf]
    %v2188 = vld [vmem:[%s6 + $0x3c] sm:$0xf]
    %v2205 = vunpack.c.l.b16 %v2173
    %v2206 = vunpack.c.l.b16 %v2174
    %v2207 = vunpack.c.l.b16 %v2175
    %v2208 = vunpack.c.l.b16 %v2176
    %v2209 = vunpack.c.l.b16 %v2177
    %v2210 = vunpack.c.l.b16 %v2178
    %v2211 = vunpack.c.l.b16 %v2179
    %v2212 = vunpack.c.l.b16 %v2180
    %v2213 = vunpack.c.l.b16 %v2181
    %v2214 = vunpack.c.l.b16 %v2182
    %v2215 = vunpack.c.l.b16 %v2183
    %v2216 = vunpack.c.l.b16 %v2184
    %v2217 = vunpack.c.l.b16 %v2185
    %v2218 = vunpack.c.l.b16 %v2186
    %v2219 = vunpack.c.l.b16 %v2187
    %v2220 = vunpack.c.l.b16 %v2188
    %v2221 = vpack.c.b16 %v2206, %v2205
    %v2222 = vpack.c.b16 %v2208, %v2207
    %v2223 = vpack.c.b16 %v2210, %v2209
    %v2224 = vpack.c.b16 %v2212, %v2211
    %v2225 = vpack.c.b16 %v2214, %v2213
    %v2226 = vpack.c.b16 %v2216, %v2215
    %v2227 = vpack.c.b16 %v2218, %v2217
    %v2228 = vpack.c.b16 %v2220, %v2219
    %2237 = vmatprep.subr.bf16.mxu0 0
    %2238 = vmatpush1.bf16.msra.mxu0 %v2228
    %2239 = vmatprep.subr.bf16.mxu0 0
    %2240 = vmatpush1.bf16.msra.mxu0 %v2227
    %2241 = vmatprep.subr.bf16.mxu0 0
    %2242 = vmatpush1.bf16.msra.mxu0 %v2226
    %2243 = vmatprep.subr.bf16.mxu0 0
    %2244 = vmatpush1.bf16.msra.mxu0 %v2225
    %2245 = vmatprep.subr.bf16.mxu0 0
    %2246 = vmatpush1.bf16.msra.mxu0 %v2224
    %2247 = vmatprep.subr.bf16.mxu0 0
    %2248 = vmatpush1.bf16.msra.mxu0 %v2223
    %2249 = vmatprep.subr.bf16.mxu0 0
    %2250 = vmatpush1.bf16.msra.mxu0 %v2222
    %2251 = vmatprep.subr.bf16.mxu0 0
    %2252 = vmatpush1.bf16.msra.mxu0 %v2221
    %2253 = vmatprep.subr.bf16.mxu0 0
    %2254 = vmatpush2.bf16.msra.mxu0 0
    %2255 = vmatprep.subr.bf16.mxu0 0
    %2256 = vmatpush2.bf16.msra.mxu0 0
    %2257 = vmatprep.subr.bf16.mxu0 0
    %2258 = vmatpush2.bf16.msra.mxu0 0
    %2259 = vmatprep.subr.bf16.mxu0 0
    %2260 = vmatpush2.bf16.msra.mxu0 0
    %2261 = vmatprep.subr.bf16.mxu0 0
    %2262 = vmatpush2.bf16.msra.mxu0 0
    %2263 = vmatprep.subr.bf16.mxu0 0
    %2264 = vmatpush2.bf16.msra.mxu0 0
    %2265 = vmatprep.subr.bf16.mxu0 0
    %2266 = vmatpush2.bf16.msra.mxu0 0
    %2267 = vmatprep.subr.bf16.mxu0 0
    %2268 = vmatpush2.bf16.msra.mxu0 0
    %2269 = vmatprep.mubr.bf16.mxu0 0
    %2270 = vmatmul.mubr.bf16.gmra.mxu0 %v2172
    %v2271 = vpop.f32.mrf.mxu0
    %v2272 = vadd.f32 0.0, %v2271
    %v2273 = vpop.f32.mrf.mxu0
    %v2274 = vpop.f32.mrf.mxu0
    %v2275 = vpop.f32.mrf.mxu0
    %2276 = vdwg.mxu0
    %2277 = vst [vmem:[%s7] sm:$0xff] %v2272
    // Predicated region
    $region50: #{cnn_forward.1} parent=1 // pred_check
      _
    $region51: #{cnn_forward.1} parent=1 // pred_check_branch
      %2279 = sbr.rel (0) target = $region53
    $region52: #{cnn_forward.1} parent=1 // pred_region
      _
    $region53: #{cnn_forward.1} parent=1 // pred_fallthru
      _
    // Predicated region
    $region54: #{cnn_forward.1} parent=1 // pred_check
      _
    $region55: #{cnn_forward.1} parent=1 // pred_check_branch
      %2281 = sbr.rel (0) target = $region57
    $region56: #{cnn_forward.1} parent=1 // pred_region
      _
    $region57: #{cnn_forward.1} parent=1 // pred_fallthru
      _
    %2282 = vsyncpa [#allocation3], 1
    %2283 = vsyncpa [#allocation5], 1
    %2284 = vsyncpa [#allocation8], 1

</llo_original>
